<compile_context>
chip_gen: v5e
topology: v5e:2x2
jax: 0.10.0
libtpu: 0.0.40
codegen_flags: <defaults>
</compile_context>

<pallas_src>
import numpy as np
import jax
import jax.numpy as jnp
from jax import lax
from jax.experimental import pallas as pl
from jax.experimental.pallas import tpu as pltpu

# Full-precision matmuls for the pure-JAX reference; the kernel's dots use
# bf16 operands explicitly so this does not affect in-kernel codegen.
jax.config.update("jax_default_matmul_precision", "highest")

CHANNEL_SEQ = (np.array([1, 2, 3, 4, 5, 6, 7, 8, 9, 10, 11, 12, 14, 15, 13, 17, 18,
                         21, 23, 24, 27, 29, 30, 33, 35, 36, 39, 16, 20, 19, 22, 26,
                         25, 28, 32, 31, 34, 38, 37, 40]) - 1).tolist()
CHANNELS = 40   # channel_seq is a permutation of 40 channels
NPAD = 128      # lane-dense padded classifier width (real n_class columns first)


def adaptive_pool_matrix(in_size, out_size):
    """P[o, i] such that out = P @ inp matches torch AdaptiveAvgPool along one axis."""
    P = np.zeros((out_size, in_size), dtype=np.float32)
    for o in range(out_size):
        start = (o * in_size) // out_size
        end = -(((o + 1) * in_size) // -out_size)  # ceil
        P[o, start:end] = 1.0 / float(end - start)
    return P


def _elu(v):
    return jnp.where(v > 0, v, jnp.exp(jnp.minimum(v, 0.0)) - 1.0)


def _mm(a, b):
    # bf16 operands, f32 accumulation on the MXU.
    return jnp.dot(a.astype(jnp.bfloat16), b.astype(jnp.bfloat16),
                   preferred_element_type=jnp.float32,
                   precision=lax.Precision.DEFAULT)


def _l2_normalize(v):
    # Matches torch.nn.functional.normalize(p=2, dim=1, eps=1e-12).
    return v * lax.rsqrt(jnp.maximum(jnp.sum(v * v, axis=1, keepdims=True), 1e-24))


def dbjnet_kernel(x_ref, wconv_ref, wcat_ref, wfc_ref, const_ref, out_ref):
    BC = out_ref.shape[0]                 # batch rows handled by this grid step
    S = x_ref.shape[0] // BC              # time samples (static)

    x = x_ref[...]                        # (BC*S, 40) bf16, rows = (b, s)

    # ---- f32 constants (rows of one packed slab)
    b_c1  = const_ref[0:1, 0:288]
    b_c2  = const_ref[1:2, 0:192]
    b_fc2 = const_ref[2:3, 0:256]
    b_f0  = const_ref[3:4, 0:64]
    b_f1  = const_ref[4:5, 0:128]
    b_f2  = const_ref[5:6, 0:256]
    b_cls = const_ref[6:7, 0:NPAD]
    pw_ind = const_ref[8:16, 0:S].astype(jnp.bfloat16)      # (8, S) exact 0/1 pool indicator

    # ---- bf16 weights (static, 8-aligned sub-blocks of packed slabs)
    w1   = wconv_ref[0:40, :]             # (40, 288)  conv1, channel-perm folded in
    w2   = wconv_ref[40:328, 0:192]       # (288, 192) conv2
    wa   = wfc_ref[0:40, 0:64]            # fc1[0], channel-perm folded in
    wb   = wfc_ref[40:104, 0:128]         # fc1[1]
    wc   = wfc_ref[104:232, 0:256]        # fc1[2]
    wcls = wfc_ref[232:744, 0:NPAD]       # merged classifier (512, 128)

    # ---- mean branch: in-kernel per-batch time mean (sublane reduce), fc1 MLP, L2 norm
    m = jnp.mean(x.reshape(BC, S, CHANNELS).astype(jnp.float32), axis=1)   # (BC, 40)
    h = _elu(_mm(m, wa) + b_f0)                                            # (BC, 64)
    h = _elu(_mm(h, wb) + b_f1)                                            # (BC, 128)
    f1 = _l2_normalize(_mm(h, wc) + b_f2)                                  # (BC, 256)

    # ---- conv stack as two block-banded matmuls (rows batched over (b, s))
    y1 = _elu(_mm(x, w1) + b_c1)          # (BC*S, 288)  9 conv1 heights x 32 ch
    y2 = _elu(_mm(y1, w2) + b_c2)         # (BC*S, 192)  3 conv2 heights x 64 ch

    # ---- adaptive avg pool (width), batched over the batch chunk; coefficients exact
    y2b = y2.astype(jnp.bfloat16).reshape(BC, S, 192)
    pwb = jnp.broadcast_to(pw_ind[None], (BC, 8, S))
    wp = jnp.einsum("bjs,bsp->bjp", pwb, y2b,
                    preferred_element_type=jnp.float32,
                    precision=lax.Precision.DEFAULT)                        # (BC, 8, 192)

    # ---- fc2: height pool + 1/width-count folded into wcat = [wd3[0] | ... | wd3[7]].
    #      One lane-dense matmul over the pooled rows, then a block-diagonal select+sum.
    wp2 = wp.astype(jnp.bfloat16).reshape(BC * 8, 192)                      # rows = (b, j)
    g = _mm(wp2, wcat_ref[...])                                             # (BC*8, 8*256)
    rj = lax.broadcasted_iota(jnp.int32, g.shape, 0) & 7                    # j of the row
    cj = lax.broadcasted_iota(jnp.int32, g.shape, 1) >> 8                   # j' of the column block
    gm = jnp.where(rj == cj, g, 0.0)
    acc = gm[:, 0:256]
    for k in range(1, 8):                                                   # 128-aligned lane slices
        acc = acc + gm[:, k * 256:(k + 1) * 256]                            # (BC*8, 256)
    f2 = jnp.sum(acc.reshape(BC, 8, 256), axis=1) + b_fc2                   # (BC, 256)
    f2 = _l2_normalize(f2)

    # ---- merged classifier on concat([f1, f2]); lane-padded output, single store
    feat = jnp.concatenate([f1, f2], axis=1)                                # (BC, 512)
    out_ref[...] = (_mm(feat, wcls) + b_cls).astype(out_ref.dtype)


def dbjnet_forward(x, params):
    """x: (B, 40, S) float32, matching the PyTorch module's (batch, channels, samples)."""
    B, C, S = x.shape
    assert C == CHANNELS
    assert S % 8 == 0, "time axis must be a multiple of 8 (sublane-aligned reshapes)"
    n_class = params["cls_b"].shape[0]
    assert n_class <= NPAD
    f32, bf16 = jnp.float32, jnp.bfloat16
    perm = np.array(CHANNEL_SEQ)

    # batch-chunk grid ("parallel" => both v7x TensorCores once B > 8)
    if B <= 8:
        BC = B
    elif B % 8 == 0:
        BC = 8
    else:
        BC = B   # TODO(synk): pad the batch to a multiple of 8 for multi-chunk grids
    n_chunks = B // BC

    # ---- activation glue: ONE transpose+cast pass; channel permutation folded into weights
    x_all = jnp.transpose(x, (0, 2, 1)).reshape(B * S, C).astype(bf16)

    # ---- host-side constant / weight rearrangement (f32 math, bf16 at the end)
    conv1_w = np.asarray(params["conv1_w"], np.float32)               # (32, 1, 8, 1)
    conv2_w = np.asarray(params["conv2_w"], np.float32)               # (64, 32, 4, 1)

    # block-banded conv1 weight over the PERMUTED channel axis, then scatter back to
    # original channel order so the kernel consumes un-gathered x.
    w1b = np.zeros((C, 9 * 32), np.float32)
    for oh in range(9):
        w1b[oh * 4:oh * 4 + 8, oh * 32:(oh + 1) * 32] = conv1_w[:, 0, :, 0].T   # [kh, co]
    w1f = np.zeros_like(w1b)
    w1f[perm, :] = w1b
    b1 = np.tile(np.asarray(params["conv1_b"], np.float32), 9)

    w2b = np.zeros((9 * 32, 3 * 64), np.float32)
    w2k = np.transpose(conv2_w[:, :, :, 0], (2, 1, 0))                # (kh, ci, co)
    for oh2 in range(3):
        for kh in range(4):
            w2b[(oh2 * 2 + kh) * 32:(oh2 * 2 + kh + 1) * 32,
                oh2 * 64:(oh2 + 1) * 64] = w2k[kh]
    b2 = np.tile(np.asarray(params["conv2_b"], np.float32), 3)

    wconv = np.zeros((328, 288), np.float32)                          # conv slab
    wconv[0:40, :] = w1f
    wconv[40:328, 0:192] = w2b

    # adaptive pools: height pool + 1/width-count folded into fc2 weight (f32), width
    # pool kept as an exact 0/1 indicator for the kernel.
    ph = adaptive_pool_matrix(3, 8)                                   # (8, 3)
    pw = adaptive_pool_matrix(S, 8)                                   # (8, S)
    pw_ind = (pw > 0).astype(np.float32)
    pw_cnt = pw_ind.sum(axis=1)                                       # (8,)

    fc2w = np.asarray(params["fc2_w"], np.float32).reshape(256, 64, 8, 8)   # [o, c, i, j]
    wd3 = np.einsum("ocij,ih->jhco", fc2w, ph).reshape(8, 192, 256)
    wd3 = wd3 / pw_cnt[:, None, None]
    wcat = np.concatenate([wd3[j] for j in range(8)], axis=1)               # (192, 2048)

    # fc1 / merged classifier slab (744, 256)
    wa = np.asarray(params["fc1_w0"], np.float32).T                   # (40, 64)
    waf = np.zeros_like(wa)
    waf[perm, :] = wa
    wb = np.asarray(params["fc1_w1"], np.float32).T                   # (64, 128)
    wc = np.asarray(params["fc1_w2"], np.float32).T                   # (128, 256)
    cls_w = np.asarray(params["cls_w"], np.float32)                   # (n_class, 512)
    wcls = np.zeros((512, NPAD), np.float32)
    wcls[:, :n_class] = cls_w.T
    wfc = np.zeros((744, 256), np.float32)
    wfc[0:40, 0:64] = waf
    wfc[40:104, 0:128] = wb
    wfc[104:232, 0:256] = wc
    wfc[232:744, 0:NPAD] = wcls

    # f32 constant slab: biases (rows 0-6) + width-pool indicator (rows 8-15)
    CW = max(384, S)
    consts = np.zeros((24, CW), np.float32)
    consts[0, :288] = b1
    consts[1, :192] = b2
    consts[2, :256] = np.asarray(params["fc2_b"], np.float32)
    consts[3, :64] = np.asarray(params["fc1_b0"], np.float32)
    consts[4, :128] = np.asarray(params["fc1_b1"], np.float32)
    consts[5, :256] = np.asarray(params["fc1_b2"], np.float32)
    consts[6, :n_class] = np.asarray(params["cls_b"], np.float32)
    consts[8:16, :S] = pw_ind

    args = [x_all,
            jnp.asarray(wconv, bf16),
            jnp.asarray(wcat, bf16),
            jnp.asarray(wfc, bf16),
            jnp.asarray(consts, f32)]

    def wspec(a):
        nd = a.ndim
        return pl.BlockSpec(a.shape, lambda i, _n=nd: (0,) * _n)

    out = pl.pallas_call(
        dbjnet_kernel,
        out_shape=jax.ShapeDtypeStruct((B, NPAD), jnp.float32),
        grid=(n_chunks,),
        in_specs=[pl.BlockSpec((BC * S, C), lambda i: (i, 0))] + [wspec(a) for a in args[1:]],
        out_specs=pl.BlockSpec((BC, NPAD), lambda i: (i, 0)),
        compiler_params=pltpu.CompilerParams(
            dimension_semantics=("parallel",),
            # live footprint is ~3 MiB double-buffered; well under v7x's 64 MiB.
            vmem_limit_bytes=32 * 1024 * 1024),
    )(*args)
    return out[:, :n_class]


def dbjnet_reference(x, params):
    """Pure-JAX (f32) reference mirroring the PyTorch forward, for verification."""
    B, C, S = x.shape
    xp = x[:, np.array(CHANNEL_SEQ), :]
    mean = jnp.mean(xp, axis=-1)
    h = _elu(mean @ params["fc1_w0"].T + params["fc1_b0"])
    h = _elu(h @ params["fc1_w1"].T + params["fc1_b1"])
    f1 = h @ params["fc1_w2"].T + params["fc1_b2"]
    f1 = f1 / jnp.maximum(jnp.sqrt(jnp.sum(f1 * f1, axis=1, keepdims=True)), 1e-12)

    inp = xp[:, None, :, :]  # NCHW
    y = lax.conv_general_dilated(inp, params["conv1_w"], (4, 1), "VALID",
                                 dimension_numbers=("NCHW", "OIHW", "NCHW"))
    y = _elu(y + params["conv1_b"][None, :, None, None])
    y = lax.conv_general_dilated(y, params["conv2_w"], (2, 1), "VALID",
                                 dimension_numbers=("NCHW", "OIHW", "NCHW"))
    y = _elu(y + params["conv2_b"][None, :, None, None])               # (B, 64, 3, S)

    ph = jnp.asarray(adaptive_pool_matrix(3, 8))
    pw = jnp.asarray(adaptive_pool_matrix(S, 8))
    pooled = jnp.einsum("ih,jw,bchw->bcij", ph, pw, y)                  # (B, 64, 8, 8)
    flat = pooled.reshape(B, -1)
    f2 = flat @ params["fc2_w"].T + params["fc2_b"]
    f2 = f2 / jnp.maximum(jnp.sqrt(jnp.sum(f2 * f2, axis=1, keepdims=True)), 1e-12)
    feat = jnp.concatenate([f1, f2], axis=1)
    return feat @ params["cls_w"].T + params["cls_b"]


if __name__ == "__main__":
    B, S, n_class = 2, 16, 4
    key = jax.random.PRNGKey(0)
    ks = jax.random.split(key, 16)

    def rnd(k, shape, scale=0.1):
        return scale * jax.random.normal(k, shape, jnp.float32)

    params = {
        "conv1_w": rnd(ks[0], (32, 1, 8, 1)), "conv1_b": rnd(ks[1], (32,)),
        "conv2_w": rnd(ks[2], (64, 32, 4, 1)), "conv2_b": rnd(ks[3], (64,)),
        "fc1_w0": rnd(ks[4], (64, CHANNELS)), "fc1_b0": rnd(ks[5], (64,)),
        "fc1_w1": rnd(ks[6], (128, 64)), "fc1_b1": rnd(ks[7], (128,)),
        "fc1_w2": rnd(ks[8], (256, 128)), "fc1_b2": rnd(ks[9], (256,)),
        "fc2_w": rnd(ks[10], (256, 64 * 8 * 8)), "fc2_b": rnd(ks[11], (256,)),
        "cls_w": rnd(ks[12], (n_class, 512)), "cls_b": rnd(ks[13], (n_class,)),
    }
    x = jax.random.normal(ks[14], (B, CHANNELS, S), jnp.float32)

    out = jax.block_until_ready(dbjnet_forward(x, params))
    ref = jax.block_until_ready(dbjnet_reference(x, params))
    # Relaxed tolerance vs pure f32: kernel matmul operands (incl. x) are bf16.
    np.testing.assert_allclose(np.asarray(out), np.asarray(ref), rtol=2e-2, atol=5e-3)
    print("KERNEL_OK")
</pallas_src>

<mosaic_0001>
module attributes {stable_mosaic.version = 11 : i64} {
  func.func @dbjnet_kernel(%arg0: i32, %arg1: memref<32x40xbf16, #tpu.memory_space<vmem>>, %arg2: memref<328x288xbf16, #tpu.memory_space<vmem>>, %arg3: memref<192x2048xbf16, #tpu.memory_space<vmem>>, %arg4: memref<744x256xbf16, #tpu.memory_space<vmem>>, %arg5: memref<24x384xf32, #tpu.memory_space<vmem>>, %arg6: memref<2x128xf32, #tpu.memory_space<vmem>>) attributes {dimension_semantics = [#tpu.dimension_semantics<parallel>], iteration_bounds = array<i64: 1>, scalar_prefetch = 0 : i64, scratch_operands = 0 : i64, tpu.core_type = #tpu.core_type<tc>, window_params = [{transform_indices = @transform_0, window_bounds = array<i64: 32, 40>}, {pipeline_mode = #tpu.pipeline_mode<synchronous>, transform_indices = @transform_1, window_bounds = array<i64: 328, 288>}, {pipeline_mode = #tpu.pipeline_mode<synchronous>, transform_indices = @transform_2, window_bounds = array<i64: 192, 2048>}, {pipeline_mode = #tpu.pipeline_mode<synchronous>, transform_indices = @transform_3, window_bounds = array<i64: 744, 256>}, {pipeline_mode = #tpu.pipeline_mode<synchronous>, transform_indices = @transform_4, window_bounds = array<i64: 24, 384>}, {transform_indices = @transform_5, window_bounds = array<i64: 2, 128>}]} {
    %c0 = arith.constant 0 : index
    %c0_0 = arith.constant 0 : index
    %0 = vector.load %arg1[%c0, %c0_0] : memref<32x40xbf16, #tpu.memory_space<vmem>>, vector<32x40xbf16>
    %c0_1 = arith.constant 0 : index
    %c0_2 = arith.constant 0 : index
    %1 = vector.load %arg5[%c0_1, %c0_2] : memref<24x384xf32, #tpu.memory_space<vmem>>, vector<1x288xf32>
    %c1 = arith.constant 1 : index
    %c0_3 = arith.constant 0 : index
    %2 = vector.load %arg5[%c1, %c0_3] : memref<24x384xf32, #tpu.memory_space<vmem>>, vector<1x192xf32>
    %c2 = arith.constant 2 : index
    %c0_4 = arith.constant 0 : index
    %3 = vector.load %arg5[%c2, %c0_4] : memref<24x384xf32, #tpu.memory_space<vmem>>, vector<1x256xf32>
    %c3 = arith.constant 3 : index
    %c0_5 = arith.constant 0 : index
    %4 = vector.load %arg5[%c3, %c0_5] : memref<24x384xf32, #tpu.memory_space<vmem>>, vector<1x64xf32>
    %c4 = arith.constant 4 : index
    %c0_6 = arith.constant 0 : index
    %5 = vector.load %arg5[%c4, %c0_6] : memref<24x384xf32, #tpu.memory_space<vmem>>, vector<1x128xf32>
    %c5 = arith.constant 5 : index
    %c0_7 = arith.constant 0 : index
    %6 = vector.load %arg5[%c5, %c0_7] : memref<24x384xf32, #tpu.memory_space<vmem>>, vector<1x256xf32>
    %c6 = arith.constant 6 : index
    %c0_8 = arith.constant 0 : index
    %7 = vector.load %arg5[%c6, %c0_8] : memref<24x384xf32, #tpu.memory_space<vmem>>, vector<1x128xf32>
    %c8 = arith.constant 8 : index
    %c0_9 = arith.constant 0 : index
    %8 = vector.load %arg5[%c8, %c0_9] : memref<24x384xf32, #tpu.memory_space<vmem>>, vector<8x16xf32>
    %9 = arith.truncf %8 : vector<8x16xf32> to vector<8x16xbf16>
    %c0_10 = arith.constant 0 : index
    %c0_11 = arith.constant 0 : index
    %10 = vector.load %arg2[%c0_10, %c0_11] : memref<328x288xbf16, #tpu.memory_space<vmem>>, vector<40x288xbf16>
    %c40 = arith.constant 40 : index
    %c0_12 = arith.constant 0 : index
    %11 = vector.load %arg2[%c40, %c0_12] : memref<328x288xbf16, #tpu.memory_space<vmem>>, vector<288x192xbf16>
    %c0_13 = arith.constant 0 : index
    %c0_14 = arith.constant 0 : index
    %12 = vector.load %arg4[%c0_13, %c0_14] : memref<744x256xbf16, #tpu.memory_space<vmem>>, vector<40x64xbf16>
    %c40_15 = arith.constant 40 : index
    %c0_16 = arith.constant 0 : index
    %13 = vector.load %arg4[%c40_15, %c0_16] : memref<744x256xbf16, #tpu.memory_space<vmem>>, vector<64x128xbf16>
    %c104 = arith.constant 104 : index
    %c0_17 = arith.constant 0 : index
    %14 = vector.load %arg4[%c104, %c0_17] : memref<744x256xbf16, #tpu.memory_space<vmem>>, vector<128x256xbf16>
    %c232 = arith.constant 232 : index
    %c0_18 = arith.constant 0 : index
    %15 = vector.load %arg4[%c232, %c0_18] : memref<744x256xbf16, #tpu.memory_space<vmem>>, vector<512x128xbf16>
    %16 = vector.shape_cast %0 : vector<32x40xbf16> to vector<2x16x40xbf16>
    %17 = arith.extf %16 : vector<2x16x40xbf16> to vector<2x16x40xf32>
    %cst = arith.constant dense<0.000000e+00> : vector<2x40xf32>
    %18 = vector.multi_reduction <add>, %17, %cst [1] : vector<2x16x40xf32> to vector<2x40xf32>
    %cst_19 = arith.constant 1.600000e+01 : f32
    %19 = vector.broadcast %cst_19 : f32 to vector<2x40xf32>
    %20 = arith.divf %18, %19 : vector<2x40xf32>
    %21 = arith.truncf %20 : vector<2x40xf32> to vector<2x40xbf16>
    %cst_20 = arith.constant dense<0.000000e+00> : vector<2x64xf32>
    %22 = tpu.matmul %21, %12, %cst_20 {dimension_numbers = #tpu.dot_dimension_numbers<[1], [0], [0], [1], [0, 0, 1, 1], [], []>} : vector<2x40xbf16>, vector<40x64xbf16>, vector<2x64xf32> -> vector<2x64xf32>
    %23 = vector.broadcast %4 : vector<1x64xf32> to vector<2x64xf32>
    %24 = arith.addf %22, %23 : vector<2x64xf32>
    %cst_21 = arith.constant 0.000000e+00 : f32
    %25 = vector.broadcast %cst_21 : f32 to vector<2x64xf32>
    %26 = arith.cmpf ogt, %24, %25 : vector<2x64xf32>
    %cst_22 = arith.constant 0.000000e+00 : f32
    %27 = vector.broadcast %cst_22 : f32 to vector<2x64xf32>
    %28 = arith.minimumf %24, %27 : vector<2x64xf32>
    %29 = math.exp %28 : vector<2x64xf32>
    %cst_23 = arith.constant 1.000000e+00 : f32
    %30 = vector.broadcast %cst_23 : f32 to vector<2x64xf32>
    %31 = arith.subf %29, %30 : vector<2x64xf32>
    %32 = arith.select %26, %24, %31 : vector<2x64xi1>, vector<2x64xf32>
    %33 = arith.truncf %32 : vector<2x64xf32> to vector<2x64xbf16>
    %cst_24 = arith.constant dense<0.000000e+00> : vector<2x128xf32>
    %34 = tpu.matmul %33, %13, %cst_24 {dimension_numbers = #tpu.dot_dimension_numbers<[1], [0], [0], [1], [0, 0, 1, 1], [], []>} : vector<2x64xbf16>, vector<64x128xbf16>, vector<2x128xf32> -> vector<2x128xf32>
    %35 = vector.broadcast %5 : vector<1x128xf32> to vector<2x128xf32>
    %36 = arith.addf %34, %35 : vector<2x128xf32>
    %cst_25 = arith.constant 0.000000e+00 : f32
    %37 = vector.broadcast %cst_25 : f32 to vector<2x128xf32>
    %38 = arith.cmpf ogt, %36, %37 : vector<2x128xf32>
    %cst_26 = arith.constant 0.000000e+00 : f32
    %39 = vector.broadcast %cst_26 : f32 to vector<2x128xf32>
    %40 = arith.minimumf %36, %39 : vector<2x128xf32>
    %41 = math.exp %40 : vector<2x128xf32>
    %cst_27 = arith.constant 1.000000e+00 : f32
    %42 = vector.broadcast %cst_27 : f32 to vector<2x128xf32>
    %43 = arith.subf %41, %42 : vector<2x128xf32>
    %44 = arith.select %38, %36, %43 : vector<2x128xi1>, vector<2x128xf32>
    %45 = arith.truncf %44 : vector<2x128xf32> to vector<2x128xbf16>
    %cst_28 = arith.constant dense<0.000000e+00> : vector<2x256xf32>
    %46 = tpu.matmul %45, %14, %cst_28 {dimension_numbers = #tpu.dot_dimension_numbers<[1], [0], [0], [1], [0, 0, 1, 1], [], []>} : vector<2x128xbf16>, vector<128x256xbf16>, vector<2x256xf32> -> vector<2x256xf32>
    %47 = vector.broadcast %6 : vector<1x256xf32> to vector<2x256xf32>
    %48 = arith.addf %46, %47 : vector<2x256xf32>
    %49 = arith.mulf %48, %48 : vector<2x256xf32>
    %cst_29 = arith.constant dense<0.000000e+00> : vector<2xf32>
    %50 = vector.multi_reduction <add>, %49, %cst_29 [1] : vector<2x256xf32> to vector<2xf32>
    %51 = vector.shape_cast %50 : vector<2xf32> to vector<2x1xf32>
    %cst_30 = arith.constant 1.000000e-24 : f32
    %52 = vector.broadcast %cst_30 : f32 to vector<2x1xf32>
    %53 = arith.maximumf %51, %52 : vector<2x1xf32>
    %54 = math.rsqrt %53 : vector<2x1xf32>
    %55 = vector.broadcast %54 : vector<2x1xf32> to vector<2x256xf32>
    %56 = arith.mulf %48, %55 : vector<2x256xf32>
    %cst_31 = arith.constant dense<0.000000e+00> : vector<32x288xf32>
    %57 = tpu.matmul %0, %10, %cst_31 {dimension_numbers = #tpu.dot_dimension_numbers<[1], [0], [0], [1], [0, 0, 1, 1], [], []>} : vector<32x40xbf16>, vector<40x288xbf16>, vector<32x288xf32> -> vector<32x288xf32>
    %58 = vector.broadcast %1 : vector<1x288xf32> to vector<32x288xf32>
    %59 = arith.addf %57, %58 : vector<32x288xf32>
    %cst_32 = arith.constant 0.000000e+00 : f32
    %60 = vector.broadcast %cst_32 : f32 to vector<32x288xf32>
    %61 = arith.cmpf ogt, %59, %60 : vector<32x288xf32>
    %cst_33 = arith.constant 0.000000e+00 : f32
    %62 = vector.broadcast %cst_33 : f32 to vector<32x288xf32>
    %63 = arith.minimumf %59, %62 : vector<32x288xf32>
    %64 = math.exp %63 : vector<32x288xf32>
    %cst_34 = arith.constant 1.000000e+00 : f32
    %65 = vector.broadcast %cst_34 : f32 to vector<32x288xf32>
    %66 = arith.subf %64, %65 : vector<32x288xf32>
    %67 = arith.select %61, %59, %66 : vector<32x288xi1>, vector<32x288xf32>
    %68 = arith.truncf %67 : vector<32x288xf32> to vector<32x288xbf16>
    %cst_35 = arith.constant dense<0.000000e+00> : vector<32x192xf32>
    %69 = tpu.matmul %68, %11, %cst_35 {dimension_numbers = #tpu.dot_dimension_numbers<[1], [0], [0], [1], [0, 0, 1, 1], [], []>} : vector<32x288xbf16>, vector<288x192xbf16>, vector<32x192xf32> -> vector<32x192xf32>
    %70 = vector.broadcast %2 : vector<1x192xf32> to vector<32x192xf32>
    %71 = arith.addf %69, %70 : vector<32x192xf32>
    %cst_36 = arith.constant 0.000000e+00 : f32
    %72 = vector.broadcast %cst_36 : f32 to vector<32x192xf32>
    %73 = arith.cmpf ogt, %71, %72 : vector<32x192xf32>
    %cst_37 = arith.constant 0.000000e+00 : f32
    %74 = vector.broadcast %cst_37 : f32 to vector<32x192xf32>
    %75 = arith.minimumf %71, %74 : vector<32x192xf32>
    %76 = math.exp %75 : vector<32x192xf32>
    %cst_38 = arith.constant 1.000000e+00 : f32
    %77 = vector.broadcast %cst_38 : f32 to vector<32x192xf32>
    %78 = arith.subf %76, %77 : vector<32x192xf32>
    %79 = arith.select %73, %71, %78 : vector<32x192xi1>, vector<32x192xf32>
    %80 = arith.truncf %79 : vector<32x192xf32> to vector<32x192xbf16>
    %81 = vector.shape_cast %80 : vector<32x192xbf16> to vector<2x16x192xbf16>
    %82 = vector.shape_cast %9 : vector<8x16xbf16> to vector<1x8x16xbf16>
    %83 = vector.shape_cast %82 : vector<1x8x16xbf16> to vector<1x8x16xbf16>
    %84 = vector.broadcast %83 : vector<1x8x16xbf16> to vector<2x8x16xbf16>
    "tpu.trace_start"() <{level = 10 : i32, message = "bjs,bsp->bjp"}> : () -> ()
    %cst_39 = arith.constant dense<0.000000e+00> : vector<2x8x192xf32>
    %85 = tpu.matmul %84, %81, %cst_39 {dimension_numbers = #tpu.dot_dimension_numbers<[2], [1], [1], [2], [0, 0, 0, 1, 1, 2], [0], [0]>} : vector<2x8x16xbf16>, vector<2x16x192xbf16>, vector<2x8x192xf32> -> vector<2x8x192xf32>
    "tpu.trace_stop"() : () -> ()
    %86 = arith.truncf %85 : vector<2x8x192xf32> to vector<2x8x192xbf16>
    %87 = vector.shape_cast %86 : vector<2x8x192xbf16> to vector<16x192xbf16>
    %c0_40 = arith.constant 0 : index
    %c0_41 = arith.constant 0 : index
    %88 = vector.load %arg3[%c0_40, %c0_41] : memref<192x2048xbf16, #tpu.memory_space<vmem>>, vector<192x2048xbf16>
    %cst_42 = arith.constant dense<0.000000e+00> : vector<16x2048xf32>
    %89 = tpu.matmul %87, %88, %cst_42 {dimension_numbers = #tpu.dot_dimension_numbers<[1], [0], [0], [1], [0, 0, 1, 1], [], []>} : vector<16x192xbf16>, vector<192x2048xbf16>, vector<16x2048xf32> -> vector<16x2048xf32>
    %90 = tpu.iota {dimensions = array<i32: 0>} : vector<16x2048xi32>
    %c7_i32 = arith.constant 7 : i32
    %91 = vector.broadcast %c7_i32 : i32 to vector<16x2048xi32>
    %92 = arith.andi %90, %91 : vector<16x2048xi32>
    %93 = tpu.iota {dimensions = array<i32: 1>} : vector<16x2048xi32>
    %c8_i32 = arith.constant 8 : i32
    %94 = vector.broadcast %c8_i32 : i32 to vector<16x2048xi32>
    %95 = arith.shrsi %93, %94 : vector<16x2048xi32>
    %96 = arith.cmpi eq, %92, %95 : vector<16x2048xi32>
    %cst_43 = arith.constant 0.000000e+00 : f32
    %97 = vector.broadcast %cst_43 : f32 to vector<16x2048xf32>
    %98 = arith.select %96, %89, %97 : vector<16x2048xi1>, vector<16x2048xf32>
    %99 = vector.extract_strided_slice %98 {offsets = [0, 0], sizes = [16, 256], strides = [1, 1]} : vector<16x2048xf32> to vector<16x256xf32>
    %100 = vector.extract_strided_slice %98 {offsets = [0, 256], sizes = [16, 256], strides = [1, 1]} : vector<16x2048xf32> to vector<16x256xf32>
    %101 = arith.addf %99, %100 : vector<16x256xf32>
    %102 = vector.extract_strided_slice %98 {offsets = [0, 512], sizes = [16, 256], strides = [1, 1]} : vector<16x2048xf32> to vector<16x256xf32>
    %103 = arith.addf %101, %102 : vector<16x256xf32>
    %104 = vector.extract_strided_slice %98 {offsets = [0, 768], sizes = [16, 256], strides = [1, 1]} : vector<16x2048xf32> to vector<16x256xf32>
    %105 = arith.addf %103, %104 : vector<16x256xf32>
    %106 = vector.extract_strided_slice %98 {offsets = [0, 1024], sizes = [16, 256], strides = [1, 1]} : vector<16x2048xf32> to vector<16x256xf32>
    %107 = arith.addf %105, %106 : vector<16x256xf32>
    %108 = vector.extract_strided_slice %98 {offsets = [0, 1280], sizes = [16, 256], strides = [1, 1]} : vector<16x2048xf32> to vector<16x256xf32>
    %109 = arith.addf %107, %108 : vector<16x256xf32>
    %110 = vector.extract_strided_slice %98 {offsets = [0, 1536], sizes = [16, 256], strides = [1, 1]} : vector<16x2048xf32> to vector<16x256xf32>
    %111 = arith.addf %109, %110 : vector<16x256xf32>
    %112 = vector.extract_strided_slice %98 {offsets = [0, 1792], sizes = [16, 256], strides = [1, 1]} : vector<16x2048xf32> to vector<16x256xf32>
    %113 = arith.addf %111, %112 : vector<16x256xf32>
    %114 = vector.shape_cast %113 : vector<16x256xf32> to vector<2x8x256xf32>
    %cst_44 = arith.constant dense<0.000000e+00> : vector<2x256xf32>
    %115 = vector.multi_reduction <add>, %114, %cst_44 [1] : vector<2x8x256xf32> to vector<2x256xf32>
    %116 = vector.broadcast %3 : vector<1x256xf32> to vector<2x256xf32>
    %117 = arith.addf %115, %116 : vector<2x256xf32>
    %118 = arith.mulf %117, %117 : vector<2x256xf32>
    %cst_45 = arith.constant dense<0.000000e+00> : vector<2xf32>
    %119 = vector.multi_reduction <add>, %118, %cst_45 [1] : vector<2x256xf32> to vector<2xf32>
    %120 = vector.shape_cast %119 : vector<2xf32> to vector<2x1xf32>
    %cst_46 = arith.constant 1.000000e-24 : f32
    %121 = vector.broadcast %cst_46 : f32 to vector<2x1xf32>
    %122 = arith.maximumf %120, %121 : vector<2x1xf32>
    %123 = math.rsqrt %122 : vector<2x1xf32>
    %124 = vector.broadcast %123 : vector<2x1xf32> to vector<2x256xf32>
    %125 = arith.mulf %117, %124 : vector<2x256xf32>
    %126 = tpu.concatenate %56, %125 in 1 : vector<2x256xf32>, vector<2x256xf32> -> vector<2x512xf32>
    %127 = arith.truncf %126 : vector<2x512xf32> to vector<2x512xbf16>
    %cst_47 = arith.constant dense<0.000000e+00> : vector<2x128xf32>
    %128 = tpu.matmul %127, %15, %cst_47 {dimension_numbers = #tpu.dot_dimension_numbers<[1], [0], [0], [1], [0, 0, 1, 1], [], []>} : vector<2x512xbf16>, vector<512x128xbf16>, vector<2x128xf32> -> vector<2x128xf32>
    %129 = vector.broadcast %7 : vector<1x128xf32> to vector<2x128xf32>
    %130 = arith.addf %128, %129 : vector<2x128xf32>
    %c0_48 = arith.constant 0 : index
    %c0_49 = arith.constant 0 : index
    %131 = vector.load %arg6[%c0_48, %c0_49] : memref<2x128xf32, #tpu.memory_space<vmem>>, vector<2x128xf32>
    tpu.vector_store %arg6[%c0_48, %c0_49], %130 {strides = array<i32>} : memref<2x128xf32, #tpu.memory_space<vmem>>, vector<2x128xf32>,
    return
  }
  func.func @transform_0(%arg0: i32) -> (i32, i32) {
    %c0_i32 = arith.constant 0 : i32
    %c0_i32_0 = arith.constant 0 : i32
    return %arg0, %c0_i32 : i32, i32
  }
  func.func @transform_1(%arg0: i32) -> (i32, i32) {
    %c0_i32 = arith.constant 0 : i32
    %c0_i32_0 = arith.constant 0 : i32
    %c0_i32_1 = arith.constant 0 : i32
    return %c0_i32, %c0_i32_0 : i32, i32
  }
  func.func @transform_2(%arg0: i32) -> (i32, i32) {
    %c0_i32 = arith.constant 0 : i32
    %c0_i32_0 = arith.constant 0 : i32
    %c0_i32_1 = arith.constant 0 : i32
    return %c0_i32, %c0_i32_0 : i32, i32
  }
  func.func @transform_3(%arg0: i32) -> (i32, i32) {
    %c0_i32 = arith.constant 0 : i32
    %c0_i32_0 = arith.constant 0 : i32
    %c0_i32_1 = arith.constant 0 : i32
    return %c0_i32, %c0_i32_0 : i32, i32
  }
  func.func @transform_4(%arg0: i32) -> (i32, i32) {
    %c0_i32 = arith.constant 0 : i32
    %c0_i32_0 = arith.constant 0 : i32
    %c0_i32_1 = arith.constant 0 : i32
    return %c0_i32, %c0_i32_0 : i32, i32
  }
  func.func @transform_5(%arg0: i32) -> (i32, i32) {
    %c0_i32 = arith.constant 0 : i32
    %c0_i32_0 = arith.constant 0 : i32
    return %arg0, %c0_i32 : i32, i32
  }
}

</mosaic_0001>

<llo_original>
// kernel: tpu_custom_call.1
$region0: #{tpu_custom_call.1}
  #allocation0 [shape = 'u32[]', space=smem, size = 0x4, offset = 0x4, fixed_abs, tag = 'smem constant byte address 0x4 - core index']
  #allocation1 [shape = 'u32[72,128]{1,0:T(1,128)}', space=vmem, size = 0x9000, scoped, tag = 'internal scratch']
  %s0 = inlined_call_operand.vmem [shape: bf16[32,40], index: 0, kind: input, shape index: {}]
  %s1 = inlined_call_operand.vmem [shape: bf16[328,288], index: 1, kind: input, shape index: {}]
  %s2 = inlined_call_operand.hbm [shape: bf16[192,2048], index: 2, kind: input, shape index: {}]
  %s3 = inlined_call_operand.vmem [shape: bf16[744,256], index: 3, kind: input, shape index: {}]
  %s4 = inlined_call_operand.vmem [shape: f32[24,384], index: 4, kind: input, shape index: {}]
  %s5 = inlined_call_operand.hbm [shape: f32[2,128], index: 5, kind: output, shape index: {}]
  %s6 = sld [smem:[#allocation0]]
  $region34: #{tpu_custom_call.1} parent=0
    _
  %s8 = ssub.s32 1, %s6
  %s9 = scalar_select 0, %s8, %s6
  $region1: #{tpu_custom_call.1} parent=0
    #allocation2 [shape = 'u8[786432]{0}', space=vmem, size = 0xc0000, scoped, tag = 'input window, operand 2, single buffered']
    #allocation3 [shape = 's32[1]{0}', space=sflag, size = 0x4, scoped, tag = 'scoped memory for tpu_custom_call.1']
    #allocation4 [shape = 's32[1]{0}', space=sflag, size = 0x4, scoped, tag = 'scoped memory for tpu_custom_call.1']
    #allocation5 [shape = 'u8[1024]{0}', space=vmem, size = 0x400, scoped, tag = 'output window, operand 0, single buffered']
    %10 = vsyncpa [#allocation3], 0
    %11 = vsyncpa [#allocation4], 0
    // Predicated region
    $region2: #{tpu_custom_call.1} parent=1 // pred_check
      _
    $region3: #{tpu_custom_call.1} parent=1 // pred_check_branch
      %13 = sbr.rel (0) target = $region5
    $region4: #{tpu_custom_call.1} parent=1 // pred_region
      _
    $region5: #{tpu_custom_call.1} parent=1 // pred_fallthru
      _
    // Predicated region
    $region6: #{tpu_custom_call.1} parent=1 // pred_check
      _
    $region7: #{tpu_custom_call.1} parent=1 // pred_check_branch
      %15 = sbr.rel (0) target = $region9
    $region8: #{tpu_custom_call.1} parent=1 // pred_region
      _
    $region9: #{tpu_custom_call.1} parent=1 // pred_fallthru
      _
    // Predicated region
    $region10: #{tpu_custom_call.1} parent=1 // pred_check
      _
    $region11: #{tpu_custom_call.1} parent=1 // pred_check_branch
      %17 = sbr.rel (0) target = $region13
    $region12: #{tpu_custom_call.1} parent=1 // pred_region
      %19 = vsyncadd [#allocation3], 0
      %s20 = sshll.u32 %s2, 4
      %s21 = int_to_ptr.hbm [resolvable:$true] %s20
      %s22 = sshll.u32 [#allocation2], 4
      %s23 = int_to_ptr.vmem [resolvable:$true] %s22
      %28 = dma.hbm_to_vmem [thread:$0]  %s21, 24576, %s23, [#allocation3], 1024, 1024, 64
    $region13: #{tpu_custom_call.1} parent=1 // pred_fallthru
      _
    // Predicated region
    $region14: #{tpu_custom_call.1} parent=1 // pred_check
      _
    $region15: #{tpu_custom_call.1} parent=1 // pred_check_branch
      %30 = sbr.rel (0) target = $region17
    $region16: #{tpu_custom_call.1} parent=1 // pred_region
      _
    $region17: #{tpu_custom_call.1} parent=1 // pred_fallthru
      _
    // Predicated region
    $region18: #{tpu_custom_call.1} parent=1 // pred_check
      _
    $region19: #{tpu_custom_call.1} parent=1 // pred_check_branch
      %32 = sbr.rel (0) target = $region21
    $region20: #{tpu_custom_call.1} parent=1 // pred_region
      _
    $region21: #{tpu_custom_call.1} parent=1 // pred_fallthru
      _
    // Predicated region
    $region22: #{tpu_custom_call.1} parent=1 // pred_check
      _
    $region23: #{tpu_custom_call.1} parent=1 // pred_check_branch
      %34 = sbr.rel (0) target = $region25
    $region24: #{tpu_custom_call.1} parent=1 // pred_region
      %36 = dma.done [#allocation3], 24576
    $region25: #{tpu_custom_call.1} parent=1 // pred_fallthru
      _
    %v38 = vld [vmem:[%s0] sm:$0xf]
    %v39 = vld [vmem:[%s0 + $0x4] sm:$0xf]
    %v40 = vld [vmem:[%s0 + $0x8] sm:$0xf]
    %v41 = vld [vmem:[%s0 + $0xc] sm:$0xf]
    %v42 = vld [vmem:[%s4] ss:$8 sm:$0x7]
    %s43 = scalar_lea.vmem %s4, 1
    %v44 = vld [vmem:[%s43] ss:$8 sm:$0x3]
    %s45 = scalar_lea.vmem %s4, 2
    %v46 = vld [vmem:[%s45] ss:$8 sm:$0x3]
    %v47 = vld [vmem:[%s4 + $0x3] ss:$0 sm:$0xff]
    %v48 = vld [vmem:[%s4 + $0x4] ss:$0 sm:$0xff]
    %s49 = scalar_lea.vmem %s4, 5
    %v50 = vld [vmem:[%s49] ss:$8 sm:$0x3]
    %v51 = vld [vmem:[%s4 + $0x6] ss:$0 sm:$0xff]
    %v52 = vld [vmem:[%s4 + $0x18] sm:$0xff]
    %v53 = vpack.c.bf16 %v52, %v52
    %v54 = vld [vmem:[%s1] sm:$0xff]
    %v55 = vld [vmem:[%s1 + $0x8] sm:$0xf]
    %v56 = vld [vmem:[%s1 + $0xc] sm:$0xff]
    %v57 = vld [vmem:[%s1 + $0x14] sm:$0xf]
    %v58 = vld [vmem:[%s1 + $0x18] sm:$0xff]
    %v59 = vld [vmem:[%s1 + $0x20] sm:$0xf]
    %v60 = vld [vmem:[%s1 + $0x24] sm:$0xff]
    %v61 = vld [vmem:[%s1 + $0x2c] sm:$0xf]
    %v62 = vld [vmem:[%s1 + $0x30] sm:$0xff]
    %v63 = vld [vmem:[%s1 + $0x38] sm:$0xf]
    %v64 = vld [vmem:[%s1 + $0x3c] sm:$0xff]
    %v65 = vld [vmem:[%s1 + $0x48] sm:$0xff]
    %v66 = vld [vmem:[%s1 + $0x54] sm:$0xff]
    %v67 = vld [vmem:[%s1 + $0x60] sm:$0xff]
    %v68 = vld [vmem:[%s1 + $0x6c] sm:$0xff]
    %v69 = vld [vmem:[%s1 + $0x78] sm:$0xff]
    %v70 = vld [vmem:[%s1 + $0x84] sm:$0xff]
    %v71 = vld [vmem:[%s1 + $0x90] sm:$0xff]
    %v72 = vld [vmem:[%s1 + $0x9c] sm:$0xff]
    %v73 = vld [vmem:[%s1 + $0xa8] sm:$0xff]
    %v74 = vld [vmem:[%s1 + $0xb4] sm:$0xff]
    %v75 = vld [vmem:[%s1 + $0xc0] sm:$0xff]
    %v76 = vld [vmem:[%s1 + $0xcc] sm:$0xff]
    %v77 = vld [vmem:[%s1 + $0xd8] sm:$0xff]
    %v78 = vld [vmem:[%s1 + $0xe4] sm:$0xff]
    %v79 = vld [vmem:[%s1 + $0xf0] sm:$0xff]
    %v80 = vld [vmem:[%s1 + $0xfc] sm:$0xff]
    %v81 = vld [vmem:[%s1 + $0x108] sm:$0xff]
    %v82 = vld [vmem:[%s1 + $0x114] sm:$0xff]
    %v83 = vld [vmem:[%s1 + $0x120] sm:$0xff]
    %v84 = vld [vmem:[%s1 + $0x12c] sm:$0xff]
    %v85 = vld [vmem:[%s1 + $0x138] sm:$0xff]
    %v86 = vld [vmem:[%s1 + $0x144] sm:$0xff]
    %v87 = vld [vmem:[%s1 + $0x150] sm:$0xff]
    %v88 = vld [vmem:[%s1 + $0x15c] sm:$0xff]
    %v89 = vld [vmem:[%s1 + $0x168] sm:$0xff]
    %v90 = vld [vmem:[%s1 + $0x174] sm:$0xff]
    %v91 = vld [vmem:[%s1 + $0x180] sm:$0xff]
    %v92 = vld [vmem:[%s1 + $0x18c] sm:$0xff]
    %v93 = vld [vmem:[%s1 + $0x198] sm:$0xff]
    %v94 = vld [vmem:[%s1 + $0x1a4] sm:$0xff]
    %v95 = vld [vmem:[%s1 + $0x1b0] sm:$0xff]
    %v96 = vld [vmem:[%s1 + $0x1bc] sm:$0xff]
    %v97 = vld [vmem:[%s1 + $0x1c8] sm:$0xff]
    %v98 = vld [vmem:[%s1 + $0x1d4] sm:$0xff]
    %v99 = vld [vmem:[%s1 + $0x1e0] sm:$0xff]
    %v100 = vld [vmem:[%s3] sm:$0xf]
    %v101 = vld [vmem:[%s3 + $0x8] sm:$0xf]
    %v102 = vld [vmem:[%s3 + $0x10] sm:$0xf]
    %v103 = vld [vmem:[%s3 + $0x18] sm:$0xf]
    %v104 = vld [vmem:[%s3 + $0x20] sm:$0xf]
    %v105 = vld [vmem:[%s3 + $0x28] sm:$0xf]
    %v106 = vld [vmem:[%s3 + $0x30] sm:$0xf]
    %v107 = vld [vmem:[%s3 + $0x38] sm:$0xf]
    %v108 = vld [vmem:[%s3 + $0x40] sm:$0xf]
    %v109 = vld [vmem:[%s3 + $0x48] sm:$0xf]
    %v110 = vld [vmem:[%s3 + $0x50] sm:$0xf]
    %v111 = vld [vmem:[%s3 + $0x58] sm:$0xf]
    %v112 = vld [vmem:[%s3 + $0x60] sm:$0xf]
    %v113 = vld [vmem:[%s3 + $0x68] sm:$0xff]
    %v114 = vld [vmem:[%s3 + $0x70] sm:$0xff]
    %v115 = vld [vmem:[%s3 + $0x78] sm:$0xff]
    %v116 = vld [vmem:[%s3 + $0x80] sm:$0xff]
    %v117 = vld [vmem:[%s3 + $0x88] sm:$0xff]
    %v118 = vld [vmem:[%s3 + $0x90] sm:$0xff]
    %v119 = vld [vmem:[%s3 + $0x98] sm:$0xff]
    %v120 = vld [vmem:[%s3 + $0xa0] sm:$0xff]
    %v121 = vld [vmem:[%s3 + $0xa8] sm:$0xff]
    %v122 = vld [vmem:[%s3 + $0xb0] sm:$0xff]
    %v123 = vld [vmem:[%s3 + $0xb8] sm:$0xff]
    %v124 = vld [vmem:[%s3 + $0xc0] sm:$0xff]
    %v125 = vld [vmem:[%s3 + $0xc8] sm:$0xff]
    %v126 = vld [vmem:[%s3 + $0xd0] sm:$0xff]
    %v127 = vld [vmem:[%s3 + $0xd8] sm:$0xff]
    %v128 = vld [vmem:[%s3 + $0xe0] sm:$0xff]
    %v129 = vld [vmem:[%s3 + $0xe8] sm:$0xf]
    %v130 = vld [vmem:[%s3 + $0xf0] sm:$0xf]
    %v131 = vld [vmem:[%s3 + $0xf8] sm:$0xf]
    %v132 = vld [vmem:[%s3 + $0x100] sm:$0xf]
    %v133 = vld [vmem:[%s3 + $0x108] sm:$0xf]
    %v134 = vld [vmem:[%s3 + $0x110] sm:$0xf]
    %v135 = vld [vmem:[%s3 + $0x118] sm:$0xf]
    %v136 = vld [vmem:[%s3 + $0x120] sm:$0xf]
    %v137 = vld [vmem:[%s3 + $0x128] sm:$0xf]
    %v138 = vld [vmem:[%s3 + $0x130] sm:$0xf]
    %v139 = vld [vmem:[%s3 + $0x138] sm:$0xf]
    %v140 = vld [vmem:[%s3 + $0x140] sm:$0xf]
    %v141 = vld [vmem:[%s3 + $0x148] sm:$0xf]
    %v142 = vld [vmem:[%s3 + $0x150] sm:$0xf]
    %v143 = vld [vmem:[%s3 + $0x158] sm:$0xf]
    %v144 = vld [vmem:[%s3 + $0x160] sm:$0xf]
    %v145 = vld [vmem:[%s3 + $0x168] sm:$0xf]
    %v146 = vld [vmem:[%s3 + $0x170] sm:$0xf]
    %v147 = vld [vmem:[%s3 + $0x178] sm:$0xf]
    %v148 = vld [vmem:[%s3 + $0x180] sm:$0xf]
    %v149 = vld [vmem:[%s3 + $0x188] sm:$0xf]
    %v150 = vld [vmem:[%s3 + $0x190] sm:$0xf]
    %v151 = vld [vmem:[%s3 + $0x198] sm:$0xf]
    %v152 = vld [vmem:[%s3 + $0x1a0] sm:$0xf]
    %v153 = vld [vmem:[%s3 + $0x1a8] sm:$0xf]
    %v154 = vld [vmem:[%s3 + $0x1b0] sm:$0xf]
    %v155 = vld [vmem:[%s3 + $0x1b8] sm:$0xf]
    %v156 = vld [vmem:[%s3 + $0x1c0] sm:$0xf]
    %v157 = vld [vmem:[%s3 + $0x1c8] sm:$0xf]
    %v158 = vld [vmem:[%s3 + $0x1d0] sm:$0xf]
    %v159 = vld [vmem:[%s3 + $0x1d8] sm:$0xf]
    %v160 = vld [vmem:[%s3 + $0x1e0] sm:$0xf]
    %v161 = vld [vmem:[%s3 + $0x1e8] sm:$0xf]
    %v162 = vld [vmem:[%s3 + $0x1f0] sm:$0xf]
    %v163 = vld [vmem:[%s3 + $0x1f8] sm:$0xf]
    %v164 = vld [vmem:[%s3 + $0x200] sm:$0xf]
    %v165 = vld [vmem:[%s3 + $0x208] sm:$0xf]
    %v166 = vld [vmem:[%s3 + $0x210] sm:$0xf]
    %v167 = vld [vmem:[%s3 + $0x218] sm:$0xf]
    %v168 = vld [vmem:[%s3 + $0x220] sm:$0xf]
    %v169 = vld [vmem:[%s3 + $0x228] sm:$0xf]
    %v170 = vld [vmem:[%s3 + $0x230] sm:$0xf]
    %v171 = vld [vmem:[%s3 + $0x238] sm:$0xf]
    %v172 = vld [vmem:[%s3 + $0x240] sm:$0xf]
    %v173 = vld [vmem:[%s3 + $0x248] sm:$0xf]
    %v174 = vld [vmem:[%s3 + $0x250] sm:$0xf]
    %v175 = vld [vmem:[%s3 + $0x258] sm:$0xf]
    %v176 = vld [vmem:[%s3 + $0x260] sm:$0xf]
    %v177 = vld [vmem:[%s3 + $0x268] sm:$0xf]
    %v178 = vld [vmem:[%s3 + $0x270] sm:$0xf]
    %v179 = vld [vmem:[%s3 + $0x278] sm:$0xf]
    %v180 = vld [vmem:[%s3 + $0x280] sm:$0xf]
    %v181 = vld [vmem:[%s3 + $0x288] sm:$0xf]
    %v182 = vld [vmem:[%s3 + $0x290] sm:$0xf]
    %v183 = vld [vmem:[%s3 + $0x298] sm:$0xf]
    %v184 = vld [vmem:[%s3 + $0x2a0] sm:$0xf]
    %v185 = vld [vmem:[%s3 + $0x2a8] sm:$0xf]
    %v186 = vld [vmem:[%s3 + $0x2b0] sm:$0xf]
    %v187 = vld [vmem:[%s3 + $0x2b8] sm:$0xf]
    %v188 = vld [vmem:[%s3 + $0x2c0] sm:$0xf]
    %v189 = vld [vmem:[%s3 + $0x2c8] sm:$0xf]
    %v190 = vld [vmem:[%s3 + $0x2d0] sm:$0xf]
    %v191 = vld [vmem:[%s3 + $0x2d8] sm:$0xf]
    %v192 = vld [vmem:[%s3 + $0x2e0] sm:$0xf]
    %v193 = vunpack.c.l.bf16 %v38
    %v194 = vunpack.c.l.bf16 %v39
    %v195 = vunpack.c.l.bf16 %v40
    %v196 = vunpack.c.l.bf16 %v41
    %vm197 = vcmask 326656
    %v198 = vsel %vm197, %v193, 0.0
    %v199 = vsel %vm197, %v194, 0.0
    %v200 = vadd.f32 %v198, %v199
    %v201 = vrot.slane %v200, 4
    %v202 = vadd.f32 %v200, %v201
    %v203 = vrot.slane %v202, 2
    %v204 = vadd.f32 %v202, %v203
    %v205 = vrot.slane %v204, 1
    %v206 = vadd.f32 %v204, %v205
    %v207 = vsel %vm197, %v195, 0.0
    %v208 = vsel %vm197, %v196, 0.0
    %v209 = vadd.f32 %v207, %v208
    %v210 = vrot.slane %v209, 4
    %v211 = vadd.f32 %v209, %v210
    %v212 = vrot.slane %v211, 2
    %v213 = vadd.f32 %v211, %v212
    %v214 = vrot.slane %v213, 1
    %v215 = vadd.f32 %v213, %v214
    %v216 = vrcp.pop 16.0
    %v217 = vmul.f32 16.0, %v216
    %v218 = vsub.f32 1.0, %v217
    %v219 = vmul.f32 %v216, %v218
    %v220 = vadd.f32 %v216, %v219
    %vm221 = vweird.f32 %v216
    %v222 = vsel %vm221, %v216, %v220
    %v223 = vmul.f32 %v206, %v222
    %v224 = vmul.f32 %v215, %v222
    %v225 = vpack.c.bf16 %v223, %v223
    %v226 = vpack.c.bf16 %v224, %v224
    %v229 = vunpack.c.l.b16 %v225
    %v230 = vunpack.c.l.b16 %v226
    %vm231 = vcmask 1041409
    %v232 = vsel %vm231, %v230, %v229
    %v233 = vpack.c.b16 %v232, %v232
    %v239 = vunpack.c.l.b16 %v100
    %v240 = vunpack.c.l.b16 %v101
    %v241 = vunpack.c.l.b16 %v102
    %v242 = vunpack.c.l.b16 %v103
    %v243 = vunpack.c.l.b16 %v104
    %v244 = vpack.c.b16 %v240, %v239
    %v245 = vpack.c.b16 %v242, %v241
    %v246 = vpack.c.b16 %v243, %v243
    %v250 = vsel %vm197, %v233, 0
    %vm252 = vcmask 1043456
    %v254 = vsel %vm252, %v246, 0
    %256 = vmatpush.bf16.msra.mxu0 0
    %257 = vmatpush.bf16.msra.mxu0 0
    %258 = vmatpush.bf16.msra.mxu0 0
    %259 = vmatpush.bf16.msra.mxu0 0
    %260 = vmatpush.bf16.msra.mxu0 0
    %261 = vmatpush.bf16.msra.mxu0 %v254
    %262 = vmatpush.bf16.msra.mxu0 %v245
    %263 = vmatpush.bf16.msra.mxu0 %v244
    %264 = vmatmul.bf16.gmra.mxu0 %v250
    %v265 = vpop.f32.mrf.mxu0
    %v266 = vadd.f32 %v47, %v265
    %v267 = vpop.f32.mrf.mxu0
    %268 = vdwg.mxu0
    %vm269 = vcmp.gt.f32.partialorder %v266, 0.0
    %v270 = vmin.f32 %v266, 0.0
    %v271 = vmul.f32 %v270, 1.442695
    %v272 = vpow.pop %v271
    %v273 = vsub.f32 %v272, 1.0
    %v274 = vsel %vm269, %v266, %v273
    %v275 = vpack.c.bf16 %v274, %v274
    %v284 = vunpack.c.l.b16 %v105
    %v285 = vunpack.c.l.b16 %v106
    %v286 = vunpack.c.l.b16 %v107
    %v287 = vunpack.c.l.b16 %v108
    %v288 = vunpack.c.l.b16 %v109
    %v289 = vunpack.c.l.b16 %v110
    %v290 = vunpack.c.l.b16 %v111
    %v291 = vunpack.c.l.b16 %v112
    %v292 = vpack.c.b16 %v285, %v284
    %v293 = vpack.c.b16 %v287, %v286
    %v294 = vpack.c.b16 %v289, %v288
    %v295 = vpack.c.b16 %v291, %v290
    %vm300 = vcmask 523264
    %v302 = vsel %vm300, %v275, 0
    %304 = vmatpush.bf16.msra.mxu0 0
    %305 = vmatpush.bf16.msra.mxu0 0
    %306 = vmatpush.bf16.msra.mxu0 0
    %307 = vmatpush.bf16.msra.mxu0 0
    %308 = vmatpush.bf16.msra.mxu0 %v295
    %309 = vmatpush.bf16.msra.mxu0 %v294
    %310 = vmatpush.bf16.msra.mxu0 %v293
    %311 = vmatpush.bf16.msra.mxu0 %v292
    %312 = vmatmul.bf16.gmra.mxu0 %v302
    %v313 = vpop.f32.mrf.mxu0
    %v314 = vadd.f32 %v48, %v313
    %v315 = vpop.f32.mrf.mxu0
    %316 = vdwg.mxu0
    %vm317 = vcmp.gt.f32.partialorder %v314, 0.0
    %v318 = vmin.f32 %v314, 0.0
    %v319 = vmul.f32 %v318, 1.442695
    %v320 = vpow.pop %v319
    %v321 = vsub.f32 %v320, 1.0
    %v322 = vsel %vm317, %v314, %v321
    %v323 = vpack.c.bf16 %v322, %v322
    %v325 = vperm.slane %v50, 0
    %v326 = vperm.slane %v50, 1
    %v345 = vunpack.c.l.b16 %v113
    %v346 = vunpack.c.h.b16 %v113
    %v347 = vunpack.c.l.b16 %v114
    %v348 = vunpack.c.h.b16 %v114
    %v349 = vunpack.c.l.b16 %v115
    %v350 = vunpack.c.h.b16 %v115
    %v351 = vunpack.c.l.b16 %v116
    %v352 = vunpack.c.h.b16 %v116
    %v353 = vunpack.c.l.b16 %v117
    %v354 = vunpack.c.h.b16 %v117
    %v355 = vunpack.c.l.b16 %v118
    %v356 = vunpack.c.h.b16 %v118
    %v357 = vunpack.c.l.b16 %v119
    %v358 = vunpack.c.h.b16 %v119
    %v359 = vunpack.c.l.b16 %v120
    %v360 = vunpack.c.h.b16 %v120
    %v361 = vunpack.c.l.b16 %v121
    %v362 = vunpack.c.h.b16 %v121
    %v363 = vunpack.c.l.b16 %v122
    %v364 = vunpack.c.h.b16 %v122
    %v365 = vunpack.c.l.b16 %v123
    %v366 = vunpack.c.h.b16 %v123
    %v367 = vunpack.c.l.b16 %v124
    %v368 = vunpack.c.h.b16 %v124
    %v369 = vunpack.c.l.b16 %v125
    %v370 = vunpack.c.h.b16 %v125
    %v371 = vunpack.c.l.b16 %v126
    %v372 = vunpack.c.h.b16 %v126
    %v373 = vunpack.c.l.b16 %v127
    %v374 = vunpack.c.h.b16 %v127
    %v375 = vunpack.c.l.b16 %v128
    %v376 = vunpack.c.h.b16 %v128
    %v377 = vpack.c.b16 %v347, %v345
    %v378 = vpack.c.b16 %v348, %v346
    %v379 = vpack.c.b16 %v351, %v349
    %v380 = vpack.c.b16 %v352, %v350
    %v381 = vpack.c.b16 %v355, %v353
    %v382 = vpack.c.b16 %v356, %v354
    %v383 = vpack.c.b16 %v359, %v357
    %v384 = vpack.c.b16 %v360, %v358
    %v385 = vpack.c.b16 %v363, %v361
    %v386 = vpack.c.b16 %v364, %v362
    %v387 = vpack.c.b16 %v367, %v365
    %v388 = vpack.c.b16 %v368, %v366
    %v389 = vpack.c.b16 %v371, %v369
    %v390 = vpack.c.b16 %v372, %v370
    %v391 = vpack.c.b16 %v375, %v373
    %v392 = vpack.c.b16 %v376, %v374
    %409 = vmatpush.bf16.msra.mxu0 %v391
    %410 = vmatpush.bf16.msra.mxu0 %v389
    %411 = vmatpush.bf16.msra.mxu0 %v387
    %412 = vmatpush.bf16.msra.mxu0 %v385
    %413 = vmatpush.bf16.msra.mxu0 %v383
    %414 = vmatpush.bf16.msra.mxu0 %v381
    %415 = vmatpush.bf16.msra.mxu0 %v379
    %416 = vmatpush.bf16.msra.mxu0 %v377
    %417 = vmatmul.bf16.gmra.mxu0 %v323
    %v418 = vpop.f32.mrf.mxu0
    %v419 = vadd.f32 %v325, %v418
    %v420 = vpop.f32.mrf.mxu0
    %421 = vdwg.mxu0
    %422 = vmatpush.bf16.msra.mxu0 %v392
    %423 = vmatpush.bf16.msra.mxu0 %v390
    %424 = vmatpush.bf16.msra.mxu0 %v388
    %425 = vmatpush.bf16.msra.mxu0 %v386
    %426 = vmatpush.bf16.msra.mxu0 %v384
    %427 = vmatpush.bf16.msra.mxu0 %v382
    %428 = vmatpush.bf16.msra.mxu0 %v380
    %429 = vmatpush.bf16.msra.mxu0 %v378
    %430 = vmatmul.bf16.gmra.mxu0 %v323
    %v431 = vpop.f32.mrf.mxu0
    %v432 = vadd.f32 %v326, %v431
    %v433 = vpop.f32.mrf.mxu0
    %434 = vdwg.mxu0
    %v435 = vmul.f32 %v419, %v419
    %v436 = vmul.f32 %v432, %v432
    %vm437 = vcmask 1041408
    %v438 = vsel %vm437, %v435, 0.0
    %v439 = vsel %vm437, %v436, 0.0
    %v440 = vadd.f32 %v438, %v439
    %441 = vadd.xlane.f32.xlu0 %v440
    %v442 = vpop.xlane.xlu0 %441
    %v443 = vmax.f32 %v442, 1e-24
    %v444 = vrsqrt.pop %v443
    %v445 = vmul.f32 %v444, %v443
    %v446 = vmul.f32 %v445, %v444
    %v447 = vmul.f32 0.5, %v446
    %v448 = vsub.f32 1.5, %v447
    %v449 = vmul.f32 %v444, %v448
    %vm450 = vweird.f32 %v443
    %vm451 = vweird.f32 %v444
    %vm452 = vmor %vm450, %vm451
    %v453 = vsel %vm452, %v444, %v449
    %v454 = vmul.f32 %v419, %v453
    %v455 = vmul.f32 %v432, %v453
    %v457 = vperm.slane %v42, 0
    %v458 = vperm.slane %v42, 1
    %v459 = vperm.slane %v42, 2
    %v467 = vunpack.c.l.b16 %v38
    %v468 = vunpack.c.l.b16 %v39
    %v469 = vunpack.c.l.b16 %v40
    %v470 = vunpack.c.l.b16 %v41
    %v471 = vpack.c.b16 %v468, %v467
    %v472 = vpack.c.b16 %v470, %v469
    %v483 = vunpack.c.l.b16 %v54
    %v484 = vunpack.c.h.b16 %v54
    %v485 = vunpack.c.l.b16 %v55
    %v486 = vunpack.c.l.b16 %v56
    %v487 = vunpack.c.h.b16 %v56
    %v488 = vunpack.c.l.b16 %v57
    %v489 = vunpack.c.l.b16 %v58
    %v490 = vunpack.c.h.b16 %v58
    %v491 = vunpack.c.l.b16 %v59
    %v492 = vunpack.c.l.b16 %v60
    %v493 = vunpack.c.h.b16 %v60
    %v494 = vunpack.c.l.b16 %v61
    %v495 = vunpack.c.l.b16 %v62
    %v496 = vunpack.c.h.b16 %v62
    %v497 = vunpack.c.l.b16 %v63
    %v498 = vpack.c.b16 %v486, %v483
    %v499 = vpack.c.b16 %v487, %v484
    %v500 = vpack.c.b16 %v488, %v485
    %v501 = vpack.c.b16 %v492, %v489
    %v502 = vpack.c.b16 %v493, %v490
    %v503 = vpack.c.b16 %v494, %v491
    %v504 = vpack.c.b16 %v495, %v495
    %v505 = vpack.c.b16 %v496, %v496
    %v506 = vpack.c.b16 %v497, %v497
    %v514 = vsel %vm197, %v471, 0
    %v517 = vsel %vm197, %v472, 0
    %v520 = vsel %vm252, %v504, 0
    %v523 = vsel %vm252, %v505, 0
    %v526 = vsel %vm252, %v506, 0
    %528 = vmatpush.bf16.msra.mxu0 0
    %529 = vmatpush.bf16.msra.mxu0 0
    %530 = vmatpush.bf16.msra.mxu0 0
    %531 = vmatpush.bf16.msra.mxu0 0
    %532 = vmatpush.bf16.msra.mxu0 0
    %533 = vmatpush.bf16.msra.mxu0 %v520
    %534 = vmatpush.bf16.msra.mxu0 %v501
    %535 = vmatpush.bf16.msra.mxu0 %v498
    %536 = vmatmul.bf16.gmra.mxu0 %v514
    %v537 = vpop.f32.mrf.mxu0
    %v538 = vadd.f32 %v457, %v537
    %v539 = vpop.f32.mrf.mxu0
    %v540 = vadd.f32 %v457, %v539
    %541 = vmatmul.bf16.gmra.mxu0 %v517
    %v542 = vpop.f32.mrf.mxu0
    %v543 = vadd.f32 %v457, %v542
    %v544 = vpop.f32.mrf.mxu0
    %v545 = vadd.f32 %v457, %v544
    %546 = vdwg.mxu0
    %547 = vmatpush.bf16.msra.mxu0 0
    %548 = vmatpush.bf16.msra.mxu0 0
    %549 = vmatpush.bf16.msra.mxu0 0
    %550 = vmatpush.bf16.msra.mxu0 0
    %551 = vmatpush.bf16.msra.mxu0 0
    %552 = vmatpush.bf16.msra.mxu0 %v523
    %553 = vmatpush.bf16.msra.mxu0 %v502
    %554 = vmatpush.bf16.msra.mxu0 %v499
    %555 = vmatmul.bf16.gmra.mxu0 %v514
    %v556 = vpop.f32.mrf.mxu0
    %v557 = vadd.f32 %v458, %v556
    %v558 = vpop.f32.mrf.mxu0
    %v559 = vadd.f32 %v458, %v558
    %560 = vmatmul.bf16.gmra.mxu0 %v517
    %v561 = vpop.f32.mrf.mxu0
    %v562 = vadd.f32 %v458, %v561
    %v563 = vpop.f32.mrf.mxu0
    %v564 = vadd.f32 %v458, %v563
    %565 = vdwg.mxu0
    %566 = vmatpush.bf16.msra.mxu0 0
    %567 = vmatpush.bf16.msra.mxu0 0
    %568 = vmatpush.bf16.msra.mxu0 0
    %569 = vmatpush.bf16.msra.mxu0 0
    %570 = vmatpush.bf16.msra.mxu0 0
    %571 = vmatpush.bf16.msra.mxu0 %v526
    %572 = vmatpush.bf16.msra.mxu0 %v503
    %573 = vmatpush.bf16.msra.mxu0 %v500
    %574 = vmatmul.bf16.gmra.mxu0 %v514
    %v575 = vpop.f32.mrf.mxu0
    %v576 = vadd.f32 %v459, %v575
    %v577 = vpop.f32.mrf.mxu0
    %v578 = vadd.f32 %v459, %v577
    %579 = vmatmul.bf16.gmra.mxu0 %v517
    %v580 = vpop.f32.mrf.mxu0
    %v581 = vadd.f32 %v459, %v580
    %v582 = vpop.f32.mrf.mxu0
    %v583 = vadd.f32 %v459, %v582
    %584 = vdwg.mxu0
    %vm585 = vcmp.gt.f32.partialorder %v538, 0.0
    %vm586 = vcmp.gt.f32.partialorder %v557, 0.0
    %vm587 = vcmp.gt.f32.partialorder %v576, 0.0
    %vm588 = vcmp.gt.f32.partialorder %v540, 0.0
    %vm589 = vcmp.gt.f32.partialorder %v559, 0.0
    %vm590 = vcmp.gt.f32.partialorder %v578, 0.0
    %vm591 = vcmp.gt.f32.partialorder %v543, 0.0
    %vm592 = vcmp.gt.f32.partialorder %v562, 0.0
    %vm593 = vcmp.gt.f32.partialorder %v581, 0.0
    %vm594 = vcmp.gt.f32.partialorder %v545, 0.0
    %vm595 = vcmp.gt.f32.partialorder %v564, 0.0
    %vm596 = vcmp.gt.f32.partialorder %v583, 0.0
    %v597 = vmin.f32 %v538, 0.0
    %v598 = vmin.f32 %v557, 0.0
    %v599 = vmin.f32 %v576, 0.0
    %v600 = vmin.f32 %v540, 0.0
    %v601 = vmin.f32 %v559, 0.0
    %v602 = vmin.f32 %v578, 0.0
    %v603 = vmin.f32 %v543, 0.0
    %v604 = vmin.f32 %v562, 0.0
    %v605 = vmin.f32 %v581, 0.0
    %v606 = vmin.f32 %v545, 0.0
    %v607 = vmin.f32 %v564, 0.0
    %v608 = vmin.f32 %v583, 0.0
    %v609 = vmul.f32 %v597, 1.442695
    %v610 = vpow.pop %v609
    %v611 = vmul.f32 %v598, 1.442695
    %v612 = vpow.pop %v611
    %v613 = vmul.f32 %v599, 1.442695
    %v614 = vpow.pop %v613
    %v615 = vmul.f32 %v600, 1.442695
    %v616 = vpow.pop %v615
    %v617 = vmul.f32 %v601, 1.442695
    %v618 = vpow.pop %v617
    %v619 = vmul.f32 %v602, 1.442695
    %v620 = vpow.pop %v619
    %v621 = vmul.f32 %v603, 1.442695
    %v622 = vpow.pop %v621
    %v623 = vmul.f32 %v604, 1.442695
    %v624 = vpow.pop %v623
    %v625 = vmul.f32 %v605, 1.442695
    %v626 = vpow.pop %v625
    %v627 = vmul.f32 %v606, 1.442695
    %v628 = vpow.pop %v627
    %v629 = vmul.f32 %v607, 1.442695
    %v630 = vpow.pop %v629
    %v631 = vmul.f32 %v608, 1.442695
    %v632 = vpow.pop %v631
    %v633 = vsub.f32 %v610, 1.0
    %v634 = vsub.f32 %v612, 1.0
    %v635 = vsub.f32 %v614, 1.0
    %v636 = vsub.f32 %v616, 1.0
    %v637 = vsub.f32 %v618, 1.0
    %v638 = vsub.f32 %v620, 1.0
    %v639 = vsub.f32 %v622, 1.0
    %v640 = vsub.f32 %v624, 1.0
    %v641 = vsub.f32 %v626, 1.0
    %v642 = vsub.f32 %v628, 1.0
    %v643 = vsub.f32 %v630, 1.0
    %v644 = vsub.f32 %v632, 1.0
    %v645 = vsel %vm585, %v538, %v633
    %v646 = vsel %vm586, %v557, %v634
    %v647 = vsel %vm587, %v576, %v635
    %v648 = vsel %vm588, %v540, %v636
    %v649 = vsel %vm589, %v559, %v637
    %v650 = vsel %vm590, %v578, %v638
    %v651 = vsel %vm591, %v543, %v639
    %v652 = vsel %vm592, %v562, %v640
    %v653 = vsel %vm593, %v581, %v641
    %v654 = vsel %vm594, %v545, %v642
    %v655 = vsel %vm595, %v564, %v643
    %v656 = vsel %vm596, %v583, %v644
    %v657 = vpack.c.bf16 %v648, %v645
    %v658 = vpack.c.bf16 %v649, %v646
    %v659 = vpack.c.bf16 %v650, %v647
    %v660 = vpack.c.bf16 %v654, %v651
    %v661 = vpack.c.bf16 %v655, %v652
    %v662 = vpack.c.bf16 %v656, %v653
    %v664 = vperm.slane %v44, 0
    %v665 = vperm.slane %v44, 1
    %v704 = vunpack.c.l.b16 %v64
    %v705 = vunpack.c.h.b16 %v64
    %v706 = vunpack.c.l.b16 %v65
    %v707 = vunpack.c.h.b16 %v65
    %v708 = vunpack.c.l.b16 %v66
    %v709 = vunpack.c.h.b16 %v66
    %v710 = vunpack.c.l.b16 %v67
    %v711 = vunpack.c.h.b16 %v67
    %v712 = vunpack.c.l.b16 %v68
    %v713 = vunpack.c.h.b16 %v68
    %v714 = vunpack.c.l.b16 %v69
    %v715 = vunpack.c.h.b16 %v69
    %v716 = vunpack.c.l.b16 %v70
    %v717 = vunpack.c.h.b16 %v70
    %v718 = vunpack.c.l.b16 %v71
    %v719 = vunpack.c.h.b16 %v71
    %v720 = vunpack.c.l.b16 %v72
    %v721 = vunpack.c.h.b16 %v72
    %v722 = vunpack.c.l.b16 %v73
    %v723 = vunpack.c.h.b16 %v73
    %v724 = vunpack.c.l.b16 %v74
    %v725 = vunpack.c.h.b16 %v74
    %v726 = vunpack.c.l.b16 %v75
    %v727 = vunpack.c.h.b16 %v75
    %v728 = vunpack.c.l.b16 %v76
    %v729 = vunpack.c.h.b16 %v76
    %v730 = vunpack.c.l.b16 %v77
    %v731 = vunpack.c.h.b16 %v77
    %v732 = vunpack.c.l.b16 %v78
    %v733 = vunpack.c.h.b16 %v78
    %v734 = vunpack.c.l.b16 %v79
    %v735 = vunpack.c.h.b16 %v79
    %v736 = vunpack.c.l.b16 %v80
    %v737 = vunpack.c.h.b16 %v80
    %v738 = vunpack.c.l.b16 %v81
    %v739 = vunpack.c.h.b16 %v81
    %v740 = vunpack.c.l.b16 %v82
    %v741 = vunpack.c.h.b16 %v82
    %v742 = vunpack.c.l.b16 %v83
    %v743 = vunpack.c.h.b16 %v83
    %v744 = vunpack.c.l.b16 %v84
    %v745 = vunpack.c.h.b16 %v84
    %v746 = vunpack.c.l.b16 %v85
    %v747 = vunpack.c.h.b16 %v85
    %v748 = vunpack.c.l.b16 %v86
    %v749 = vunpack.c.h.b16 %v86
    %v750 = vunpack.c.l.b16 %v87
    %v751 = vunpack.c.h.b16 %v87
    %v752 = vunpack.c.l.b16 %v88
    %v753 = vunpack.c.h.b16 %v88
    %v754 = vunpack.c.l.b16 %v89
    %v755 = vunpack.c.h.b16 %v89
    %v756 = vunpack.c.l.b16 %v90
    %v757 = vunpack.c.h.b16 %v90
    %v758 = vunpack.c.l.b16 %v91
    %v759 = vunpack.c.h.b16 %v91
    %v760 = vunpack.c.l.b16 %v92
    %v761 = vunpack.c.h.b16 %v92
    %v762 = vunpack.c.l.b16 %v93
    %v763 = vunpack.c.h.b16 %v93
    %v764 = vunpack.c.l.b16 %v94
    %v765 = vunpack.c.h.b16 %v94
    %v766 = vunpack.c.l.b16 %v95
    %v767 = vunpack.c.h.b16 %v95
    %v768 = vunpack.c.l.b16 %v96
    %v769 = vunpack.c.h.b16 %v96
    %v770 = vunpack.c.l.b16 %v97
    %v771 = vunpack.c.h.b16 %v97
    %v772 = vunpack.c.l.b16 %v98
    %v773 = vunpack.c.h.b16 %v98
    %v774 = vunpack.c.l.b16 %v99
    %v775 = vunpack.c.h.b16 %v99
    %v776 = vpack.c.b16 %v706, %v704
    %v777 = vpack.c.b16 %v707, %v705
    %v778 = vpack.c.b16 %v710, %v708
    %v779 = vpack.c.b16 %v711, %v709
    %v780 = vpack.c.b16 %v714, %v712
    %v781 = vpack.c.b16 %v715, %v713
    %v782 = vpack.c.b16 %v718, %v716
    %v783 = vpack.c.b16 %v719, %v717
    %v784 = vpack.c.b16 %v722, %v720
    %v785 = vpack.c.b16 %v723, %v721
    %v786 = vpack.c.b16 %v726, %v724
    %v787 = vpack.c.b16 %v727, %v725
    %v788 = vpack.c.b16 %v730, %v728
    %v789 = vpack.c.b16 %v731, %v729
    %v790 = vpack.c.b16 %v734, %v732
    %v791 = vpack.c.b16 %v735, %v733
    %v792 = vpack.c.b16 %v738, %v736
    %v793 = vpack.c.b16 %v739, %v737
    %v794 = vpack.c.b16 %v742, %v740
    %v795 = vpack.c.b16 %v743, %v741
    %v796 = vpack.c.b16 %v746, %v744
    %v797 = vpack.c.b16 %v747, %v745
    %v798 = vpack.c.b16 %v750, %v748
    %v799 = vpack.c.b16 %v751, %v749
    %v800 = vpack.c.b16 %v754, %v752
    %v801 = vpack.c.b16 %v755, %v753
    %v802 = vpack.c.b16 %v758, %v756
    %v803 = vpack.c.b16 %v759, %v757
    %v804 = vpack.c.b16 %v762, %v760
    %v805 = vpack.c.b16 %v763, %v761
    %v806 = vpack.c.b16 %v766, %v764
    %v807 = vpack.c.b16 %v767, %v765
    %v808 = vpack.c.b16 %v770, %v768
    %v809 = vpack.c.b16 %v771, %v769
    %v810 = vpack.c.b16 %v774, %v772
    %v811 = vpack.c.b16 %v775, %v773
    %vm848 = vcmask 261120
    %v850 = vsel %vm848, %v659, 0
    %v853 = vsel %vm848, %v662, 0
    %855 = vmatpush.bf16.msra.mxu0 %v790
    %856 = vmatpush.bf16.msra.mxu0 %v788
    %857 = vmatpush.bf16.msra.mxu0 %v786
    %858 = vmatpush.bf16.msra.mxu0 %v784
    %859 = vmatpush.bf16.msra.mxu0 %v782
    %860 = vmatpush.bf16.msra.mxu0 %v780
    %861 = vmatpush.bf16.msra.mxu0 %v778
    %862 = vmatpush.bf16.msra.mxu0 %v776
    %863 = vmatmul.bf16.gmra.mxu0 %v657
    %v864 = vpop.f32.mrf.mxu0
    %v865 = vadd.f32 %v664, %v864
    %v866 = vpop.f32.mrf.mxu0
    %v867 = vadd.f32 %v664, %v866
    %868 = vmatmul.bf16.gmra.mxu0 %v660
    %v869 = vpop.f32.mrf.mxu0
    %v870 = vadd.f32 %v664, %v869
    %v871 = vpop.f32.mrf.mxu0
    %v872 = vadd.f32 %v664, %v871
    %873 = vdwg.mxu0
    %874 = vmatpush.bf16.msra.mxu0 %v806
    %875 = vmatpush.bf16.msra.mxu0 %v804
    %876 = vmatpush.bf16.msra.mxu0 %v802
    %877 = vmatpush.bf16.msra.mxu0 %v800
    %878 = vmatpush.bf16.msra.mxu0 %v798
    %879 = vmatpush.bf16.msra.mxu0 %v796
    %880 = vmatpush.bf16.msra.mxu0 %v794
    %881 = vmatpush.bf16.msra.mxu0 %v792
    %882 = vmatmul.bf16.gmra.mxu0 %v658
    %v883 = vpop.f32.mrf.mxu0
    %v884 = vadd.f32 %v865, %v883
    %v885 = vpop.f32.mrf.mxu0
    %v886 = vadd.f32 %v867, %v885
    %887 = vmatmul.bf16.gmra.mxu0 %v661
    %v888 = vpop.f32.mrf.mxu0
    %v889 = vadd.f32 %v870, %v888
    %v890 = vpop.f32.mrf.mxu0
    %v891 = vadd.f32 %v872, %v890
    %892 = vdwg.mxu0
    %893 = vmatpush.bf16.msra.mxu0 0
    %894 = vmatpush.bf16.msra.mxu0 0
    %895 = vmatpush.bf16.msra.mxu0 0
    %896 = vmatpush.bf16.msra.mxu0 0
    %897 = vmatpush.bf16.msra.mxu0 0
    %898 = vmatpush.bf16.msra.mxu0 0
    %899 = vmatpush.bf16.msra.mxu0 %v810
    %900 = vmatpush.bf16.msra.mxu0 %v808
    %901 = vmatmul.bf16.gmra.mxu0 %v850
    %v902 = vpop.f32.mrf.mxu0
    %v903 = vadd.f32 %v884, %v902
    %v904 = vpop.f32.mrf.mxu0
    %v905 = vadd.f32 %v886, %v904
    %906 = vmatmul.bf16.gmra.mxu0 %v853
    %v907 = vpop.f32.mrf.mxu0
    %v908 = vadd.f32 %v889, %v907
    %v909 = vpop.f32.mrf.mxu0
    %v910 = vadd.f32 %v891, %v909
    %911 = vdwg.mxu0
    %912 = vmatpush.bf16.msra.mxu0 %v791
    %913 = vmatpush.bf16.msra.mxu0 %v789
    %914 = vmatpush.bf16.msra.mxu0 %v787
    %915 = vmatpush.bf16.msra.mxu0 %v785
    %916 = vmatpush.bf16.msra.mxu0 %v783
    %917 = vmatpush.bf16.msra.mxu0 %v781
    %918 = vmatpush.bf16.msra.mxu0 %v779
    %919 = vmatpush.bf16.msra.mxu0 %v777
    %920 = vmatmul.bf16.gmra.mxu0 %v657
    %v921 = vpop.f32.mrf.mxu0
    %v922 = vadd.f32 %v665, %v921
    %v923 = vpop.f32.mrf.mxu0
    %v924 = vadd.f32 %v665, %v923
    %925 = vmatmul.bf16.gmra.mxu0 %v660
    %v926 = vpop.f32.mrf.mxu0
    %v927 = vadd.f32 %v665, %v926
    %v928 = vpop.f32.mrf.mxu0
    %v929 = vadd.f32 %v665, %v928
    %930 = vdwg.mxu0
    %931 = vmatpush.bf16.msra.mxu0 %v807
    %932 = vmatpush.bf16.msra.mxu0 %v805
    %933 = vmatpush.bf16.msra.mxu0 %v803
    %934 = vmatpush.bf16.msra.mxu0 %v801
    %935 = vmatpush.bf16.msra.mxu0 %v799
    %936 = vmatpush.bf16.msra.mxu0 %v797
    %937 = vmatpush.bf16.msra.mxu0 %v795
    %938 = vmatpush.bf16.msra.mxu0 %v793
    %939 = vmatmul.bf16.gmra.mxu0 %v658
    %v940 = vpop.f32.mrf.mxu0
    %v941 = vadd.f32 %v922, %v940
    %v942 = vpop.f32.mrf.mxu0
    %v943 = vadd.f32 %v924, %v942
    %944 = vmatmul.bf16.gmra.mxu0 %v661
    %v945 = vpop.f32.mrf.mxu0
    %v946 = vadd.f32 %v927, %v945
    %v947 = vpop.f32.mrf.mxu0
    %v948 = vadd.f32 %v929, %v947
    %949 = vdwg.mxu0
    %950 = vmatpush.bf16.msra.mxu0 0
    %951 = vmatpush.bf16.msra.mxu0 0
    %952 = vmatpush.bf16.msra.mxu0 0
    %953 = vmatpush.bf16.msra.mxu0 0
    %954 = vmatpush.bf16.msra.mxu0 0
    %955 = vmatpush.bf16.msra.mxu0 0
    %956 = vmatpush.bf16.msra.mxu0 %v811
    %957 = vmatpush.bf16.msra.mxu0 %v809
    %958 = vmatmul.bf16.gmra.mxu0 %v850
    %v959 = vpop.f32.mrf.mxu0
    %v960 = vadd.f32 %v941, %v959
    %v961 = vpop.f32.mrf.mxu0
    %v962 = vadd.f32 %v943, %v961
    %963 = vmatmul.bf16.gmra.mxu0 %v853
    %v964 = vpop.f32.mrf.mxu0
    %v965 = vadd.f32 %v946, %v964
    %v966 = vpop.f32.mrf.mxu0
    %v967 = vadd.f32 %v948, %v966
    %968 = vdwg.mxu0
    %vm969 = vcmp.gt.f32.partialorder %v903, 0.0
    %vm970 = vcmp.gt.f32.partialorder %v960, 0.0
    %vm971 = vcmp.gt.f32.partialorder %v905, 0.0
    %vm972 = vcmp.gt.f32.partialorder %v962, 0.0
    %vm973 = vcmp.gt.f32.partialorder %v908, 0.0
    %vm974 = vcmp.gt.f32.partialorder %v965, 0.0
    %vm975 = vcmp.gt.f32.partialorder %v910, 0.0
    %vm976 = vcmp.gt.f32.partialorder %v967, 0.0
    %v977 = vmin.f32 %v903, 0.0
    %v978 = vmin.f32 %v960, 0.0
    %v979 = vmin.f32 %v905, 0.0
    %v980 = vmin.f32 %v962, 0.0
    %v981 = vmin.f32 %v908, 0.0
    %v982 = vmin.f32 %v965, 0.0
    %v983 = vmin.f32 %v910, 0.0
    %v984 = vmin.f32 %v967, 0.0
    %v985 = vmul.f32 %v977, 1.442695
    %v986 = vpow.pop %v985
    %v987 = vmul.f32 %v978, 1.442695
    %v988 = vpow.pop %v987
    %v989 = vmul.f32 %v979, 1.442695
    %v990 = vpow.pop %v989
    %v991 = vmul.f32 %v980, 1.442695
    %v992 = vpow.pop %v991
    %v993 = vmul.f32 %v981, 1.442695
    %v994 = vpow.pop %v993
    %v995 = vmul.f32 %v982, 1.442695
    %v996 = vpow.pop %v995
    %v997 = vmul.f32 %v983, 1.442695
    %v998 = vpow.pop %v997
    %v999 = vmul.f32 %v984, 1.442695
    %v1000 = vpow.pop %v999
    %v1001 = vsub.f32 %v986, 1.0
    %v1002 = vsub.f32 %v988, 1.0
    %v1003 = vsub.f32 %v990, 1.0
    %v1004 = vsub.f32 %v992, 1.0
    %v1005 = vsub.f32 %v994, 1.0
    %v1006 = vsub.f32 %v996, 1.0
    %v1007 = vsub.f32 %v998, 1.0
    %v1008 = vsub.f32 %v1000, 1.0
    %v1009 = vsel %vm969, %v903, %v1001
    %v1010 = vsel %vm970, %v960, %v1002
    %v1011 = vsel %vm971, %v905, %v1003
    %v1012 = vsel %vm972, %v962, %v1004
    %v1013 = vsel %vm973, %v908, %v1005
    %v1014 = vsel %vm974, %v965, %v1006
    %v1015 = vsel %vm975, %v910, %v1007
    %v1016 = vsel %vm976, %v967, %v1008
    %v1017 = vpack.c.bf16 %v1010, %v1009
    %v1018 = vpack.c.bf16 %v1012, %v1011
    %v1019 = vpack.c.bf16 %v1014, %v1013
    %v1020 = vpack.c.bf16 %v1016, %v1015
    %v1023 = vunpack.c.l.b16 %v1017
    %v1024 = vunpack.c.h.b16 %v1017
    %v1025 = vunpack.c.l.b16 %v1018
    %v1026 = vunpack.c.h.b16 %v1018
    %v1027 = vpack.c.b16 %v1025, %v1023
    %v1028 = vpack.c.b16 %v1026, %v1024
    %vm1031 = vcmask 130048
    %v1033 = vsel %vm1031, %v53, 0
    %1035 = vmatpush.bf16.msra.mxu0 0
    %1036 = vmatpush.bf16.msra.mxu0 0
    %1037 = vmatpush.bf16.msra.mxu0 0
    %1038 = vmatpush.bf16.msra.mxu0 0
    %1039 = vmatpush.bf16.msra.mxu0 0
    %1040 = vmatpush.bf16.msra.mxu0 0
    %1041 = vmatpush.bf16.msra.mxu0 0
    %1042 = vmatpush.bf16.msra.mxu0 %v1027
    %1043 = vmatmul.bf16.gmra.mxu0 %v1033
    %v1044 = vpop.f32.mrf.mxu0
    %v1045 = vadd.f32 0.0, %v1044
    %v1046 = vpop.f32.mrf.mxu0
    %1047 = vdwg.mxu0
    %1048 = vmatpush.bf16.msra.mxu0 0
    %1049 = vmatpush.bf16.msra.mxu0 0
    %1050 = vmatpush.bf16.msra.mxu0 0
    %1051 = vmatpush.bf16.msra.mxu0 0
    %1052 = vmatpush.bf16.msra.mxu0 0
    %1053 = vmatpush.bf16.msra.mxu0 0
    %1054 = vmatpush.bf16.msra.mxu0 0
    %1055 = vmatpush.bf16.msra.mxu0 %v1028
    %1056 = vmatmul.bf16.gmra.mxu0 %v1033
    %v1057 = vpop.f32.mrf.mxu0
    %v1058 = vadd.f32 0.0, %v1057
    %v1059 = vpop.f32.mrf.mxu0
    %1060 = vdwg.mxu0
    %v1063 = vunpack.c.l.b16 %v1019
    %v1064 = vunpack.c.h.b16 %v1019
    %v1065 = vunpack.c.l.b16 %v1020
    %v1066 = vunpack.c.h.b16 %v1020
    %v1067 = vpack.c.b16 %v1065, %v1063
    %v1068 = vpack.c.b16 %v1066, %v1064
    %1071 = vmatpush.bf16.msra.mxu0 0
    %1072 = vmatpush.bf16.msra.mxu0 0
    %1073 = vmatpush.bf16.msra.mxu0 0
    %1074 = vmatpush.bf16.msra.mxu0 0
    %1075 = vmatpush.bf16.msra.mxu0 0
    %1076 = vmatpush.bf16.msra.mxu0 0
    %1077 = vmatpush.bf16.msra.mxu0 0
    %1078 = vmatpush.bf16.msra.mxu0 %v1067
    %1079 = vmatmul.bf16.gmra.mxu0 %v1033
    %v1080 = vpop.f32.mrf.mxu0
    %v1081 = vadd.f32 0.0, %v1080
    %v1082 = vpop.f32.mrf.mxu0
    %1083 = vdwg.mxu0
    %1084 = vmatpush.bf16.msra.mxu0 0
    %1085 = vmatpush.bf16.msra.mxu0 0
    %1086 = vmatpush.bf16.msra.mxu0 0
    %1087 = vmatpush.bf16.msra.mxu0 0
    %1088 = vmatpush.bf16.msra.mxu0 0
    %1089 = vmatpush.bf16.msra.mxu0 0
    %1090 = vmatpush.bf16.msra.mxu0 0
    %1091 = vmatpush.bf16.msra.mxu0 %v1068
    %1092 = vmatmul.bf16.gmra.mxu0 %v1033
    %v1093 = vpop.f32.mrf.mxu0
    %v1094 = vadd.f32 0.0, %v1093
    %v1095 = vpop.f32.mrf.mxu0
    %1096 = vdwg.mxu0
    %v1097 = vpack.c.bf16 %v1058, %v1045
    %v1098 = vpack.c.bf16 %v1094, %v1081
    %v1099 = vld [vmem:[#allocation2] sm:$0xff]
    %v1100 = vld [vmem:[#allocation2 + $0x8] sm:$0xff]
    %v1101 = vld [vmem:[#allocation2 + $0x10] sm:$0xff]
    %v1102 = vld [vmem:[#allocation2 + $0x18] sm:$0xff]
    %v1103 = vld [vmem:[#allocation2 + $0x20] sm:$0xff]
    %v1104 = vld [vmem:[#allocation2 + $0x28] sm:$0xff]
    %v1105 = vld [vmem:[#allocation2 + $0x30] sm:$0xff]
    %v1106 = vld [vmem:[#allocation2 + $0x38] sm:$0xff]
    %v1107 = vld [vmem:[#allocation2 + $0x40] sm:$0xff]
    %v1108 = vld [vmem:[#allocation2 + $0x48] sm:$0xff]
    %v1109 = vld [vmem:[#allocation2 + $0x50] sm:$0xff]
    %v1110 = vld [vmem:[#allocation2 + $0x58] sm:$0xff]
    %v1111 = vld [vmem:[#allocation2 + $0x60] sm:$0xff]
    %v1112 = vld [vmem:[#allocation2 + $0x68] sm:$0xff]
    %v1113 = vld [vmem:[#allocation2 + $0x70] sm:$0xff]
    %v1114 = vld [vmem:[#allocation2 + $0x78] sm:$0xff]
    %v1115 = vld [vmem:[#allocation2 + $0x80] sm:$0xff]
    %v1116 = vld [vmem:[#allocation2 + $0x88] sm:$0xff]
    %v1117 = vld [vmem:[#allocation2 + $0x90] sm:$0xff]
    %v1118 = vld [vmem:[#allocation2 + $0x98] sm:$0xff]
    %v1119 = vld [vmem:[#allocation2 + $0xa0] sm:$0xff]
    %v1120 = vld [vmem:[#allocation2 + $0xa8] sm:$0xff]
    %v1121 = vld [vmem:[#allocation2 + $0xb0] sm:$0xff]
    %v1122 = vld [vmem:[#allocation2 + $0xb8] sm:$0xff]
    %v1123 = vld [vmem:[#allocation2 + $0xc0] sm:$0xff]
    %v1124 = vld [vmem:[#allocation2 + $0xc8] sm:$0xff]
    %v1125 = vld [vmem:[#allocation2 + $0xd0] sm:$0xff]
    %v1126 = vld [vmem:[#allocation2 + $0xd8] sm:$0xff]
    %v1127 = vld [vmem:[#allocation2 + $0xe0] sm:$0xff]
    %v1128 = vld [vmem:[#allocation2 + $0xe8] sm:$0xff]
    %v1129 = vld [vmem:[#allocation2 + $0xf0] sm:$0xff]
    %v1130 = vld [vmem:[#allocation2 + $0xf8] sm:$0xff]
    %v1131 = vld [vmem:[#allocation2 + $0x100] sm:$0xff]
    %v1132 = vld [vmem:[#allocation2 + $0x108] sm:$0xff]
    %v1133 = vld [vmem:[#allocation2 + $0x110] sm:$0xff]
    %v1134 = vld [vmem:[#allocation2 + $0x118] sm:$0xff]
    %v1135 = vld [vmem:[#allocation2 + $0x120] sm:$0xff]
    %v1136 = vld [vmem:[#allocation2 + $0x128] sm:$0xff]
    %v1137 = vld [vmem:[#allocation2 + $0x130] sm:$0xff]
    %v1138 = vld [vmem:[#allocation2 + $0x138] sm:$0xff]
    %v1139 = vld [vmem:[#allocation2 + $0x140] sm:$0xff]
    %v1140 = vld [vmem:[#allocation2 + $0x148] sm:$0xff]
    %v1141 = vld [vmem:[#allocation2 + $0x150] sm:$0xff]
    %v1142 = vld [vmem:[#allocation2 + $0x158] sm:$0xff]
    %v1143 = vld [vmem:[#allocation2 + $0x160] sm:$0xff]
    %v1144 = vld [vmem:[#allocation2 + $0x168] sm:$0xff]
    %v1145 = vld [vmem:[#allocation2 + $0x170] sm:$0xff]
    %v1146 = vld [vmem:[#allocation2 + $0x178] sm:$0xff]
    %v1147 = vld [vmem:[#allocation2 + $0x180] sm:$0xff]
    %v1148 = vld [vmem:[#allocation2 + $0x188] sm:$0xff]
    %v1149 = vld [vmem:[#allocation2 + $0x190] sm:$0xff]
    %v1150 = vld [vmem:[#allocation2 + $0x198] sm:$0xff]
    %v1151 = vld [vmem:[#allocation2 + $0x1a0] sm:$0xff]
    %v1152 = vld [vmem:[#allocation2 + $0x1a8] sm:$0xff]
    %v1153 = vld [vmem:[#allocation2 + $0x1b0] sm:$0xff]
    %v1154 = vld [vmem:[#allocation2 + $0x1b8] sm:$0xff]
    %v1155 = vld [vmem:[#allocation2 + $0x1c0] sm:$0xff]
    %v1156 = vld [vmem:[#allocation2 + $0x1c8] sm:$0xff]
    %v1157 = vld [vmem:[#allocation2 + $0x1d0] sm:$0xff]
    %v1158 = vld [vmem:[#allocation2 + $0x1d8] sm:$0xff]
    %v1159 = vld [vmem:[#allocation2 + $0x1e0] sm:$0xff]
    %v1160 = vld [vmem:[#allocation2 + $0x1e8] sm:$0xff]
    %v1161 = vld [vmem:[#allocation2 + $0x1f0] sm:$0xff]
    %v1162 = vld [vmem:[#allocation2 + $0x1f8] sm:$0xff]
    %v1163 = vld [vmem:[#allocation2 + $0x200] sm:$0xff]
    %v1164 = vld [vmem:[#allocation2 + $0x208] sm:$0xff]
    %v1165 = vld [vmem:[#allocation2 + $0x210] sm:$0xff]
    %v1166 = vld [vmem:[#allocation2 + $0x218] sm:$0xff]
    %v1167 = vld [vmem:[#allocation2 + $0x220] sm:$0xff]
    %v1168 = vld [vmem:[#allocation2 + $0x228] sm:$0xff]
    %v1169 = vld [vmem:[#allocation2 + $0x230] sm:$0xff]
    %v1170 = vld [vmem:[#allocation2 + $0x238] sm:$0xff]
    %v1171 = vld [vmem:[#allocation2 + $0x240] sm:$0xff]
    %v1172 = vld [vmem:[#allocation2 + $0x248] sm:$0xff]
    %v1173 = vld [vmem:[#allocation2 + $0x250] sm:$0xff]
    %v1174 = vld [vmem:[#allocation2 + $0x258] sm:$0xff]
    %v1175 = vld [vmem:[#allocation2 + $0x260] sm:$0xff]
    %v1176 = vld [vmem:[#allocation2 + $0x268] sm:$0xff]
    %v1177 = vld [vmem:[#allocation2 + $0x270] sm:$0xff]
    %v1178 = vld [vmem:[#allocation2 + $0x278] sm:$0xff]
    %v1179 = vld [vmem:[#allocation2 + $0x280] sm:$0xff]
    %v1180 = vld [vmem:[#allocation2 + $0x288] sm:$0xff]
    %v1181 = vld [vmem:[#allocation2 + $0x290] sm:$0xff]
    %v1182 = vld [vmem:[#allocation2 + $0x298] sm:$0xff]
    %v1183 = vld [vmem:[#allocation2 + $0x2a0] sm:$0xff]
    %v1184 = vld [vmem:[#allocation2 + $0x2a8] sm:$0xff]
    %v1185 = vld [vmem:[#allocation2 + $0x2b0] sm:$0xff]
    %v1186 = vld [vmem:[#allocation2 + $0x2b8] sm:$0xff]
    %v1187 = vld [vmem:[#allocation2 + $0x2c0] sm:$0xff]
    %v1188 = vld [vmem:[#allocation2 + $0x2c8] sm:$0xff]
    %v1189 = vld [vmem:[#allocation2 + $0x2d0] sm:$0xff]
    %v1190 = vld [vmem:[#allocation2 + $0x2d8] sm:$0xff]
    %v1191 = vld [vmem:[#allocation2 + $0x2e0] sm:$0xff]
    %v1192 = vld [vmem:[#allocation2 + $0x2e8] sm:$0xff]
    %v1193 = vld [vmem:[#allocation2 + $0x2f0] sm:$0xff]
    %v1194 = vld [vmem:[#allocation2 + $0x2f8] sm:$0xff]
    %v1195 = vld [vmem:[#allocation2 + $0x300] sm:$0xff]
    %v1196 = vld [vmem:[#allocation2 + $0x308] sm:$0xff]
    %v1197 = vld [vmem:[#allocation2 + $0x310] sm:$0xff]
    %v1198 = vld [vmem:[#allocation2 + $0x318] sm:$0xff]
    %v1199 = vld [vmem:[#allocation2 + $0x320] sm:$0xff]
    %v1200 = vld [vmem:[#allocation2 + $0x328] sm:$0xff]
    %v1201 = vld [vmem:[#allocation2 + $0x330] sm:$0xff]
    %v1202 = vld [vmem:[#allocation2 + $0x338] sm:$0xff]
    %v1203 = vld [vmem:[#allocation2 + $0x340] sm:$0xff]
    %v1204 = vld [vmem:[#allocation2 + $0x348] sm:$0xff]
    %v1205 = vld [vmem:[#allocation2 + $0x350] sm:$0xff]
    %v1206 = vld [vmem:[#allocation2 + $0x358] sm:$0xff]
    %v1207 = vld [vmem:[#allocation2 + $0x360] sm:$0xff]
    %v1208 = vld [vmem:[#allocation2 + $0x368] sm:$0xff]
    %v1209 = vld [vmem:[#allocation2 + $0x370] sm:$0xff]
    %v1210 = vld [vmem:[#allocation2 + $0x378] sm:$0xff]
    %v1211 = vld [vmem:[#allocation2 + $0x380] sm:$0xff]
    %v1212 = vld [vmem:[#allocation2 + $0x388] sm:$0xff]
    %v1213 = vld [vmem:[#allocation2 + $0x390] sm:$0xff]
    %v1214 = vld [vmem:[#allocation2 + $0x398] sm:$0xff]
    %v1215 = vld [vmem:[#allocation2 + $0x3a0] sm:$0xff]
    %v1216 = vld [vmem:[#allocation2 + $0x3a8] sm:$0xff]
    %v1217 = vld [vmem:[#allocation2 + $0x3b0] sm:$0xff]
    %v1218 = vld [vmem:[#allocation2 + $0x3b8] sm:$0xff]
    %v1219 = vld [vmem:[#allocation2 + $0x3c0] sm:$0xff]
    %v1220 = vld [vmem:[#allocation2 + $0x3c8] sm:$0xff]
    %v1221 = vld [vmem:[#allocation2 + $0x3d0] sm:$0xff]
    %v1222 = vld [vmem:[#allocation2 + $0x3d8] sm:$0xff]
    %v1223 = vld [vmem:[#allocation2 + $0x3e0] sm:$0xff]
    %v1224 = vld [vmem:[#allocation2 + $0x3e8] sm:$0xff]
    %v1225 = vld [vmem:[#allocation2 + $0x3f0] sm:$0xff]
    %v1226 = vld [vmem:[#allocation2 + $0x3f8] sm:$0xff]
    %v1227 = vld [vmem:[#allocation2 + $0x400] sm:$0xff]
    %v1228 = vld [vmem:[#allocation2 + $0x408] sm:$0xff]
    %v1229 = vld [vmem:[#allocation2 + $0x410] sm:$0xff]
    %v1230 = vld [vmem:[#allocation2 + $0x418] sm:$0xff]
    %v1231 = vld [vmem:[#allocation2 + $0x420] sm:$0xff]
    %v1232 = vld [vmem:[#allocation2 + $0x428] sm:$0xff]
    %v1233 = vld [vmem:[#allocation2 + $0x430] sm:$0xff]
    %v1234 = vld [vmem:[#allocation2 + $0x438] sm:$0xff]
    %v1235 = vld [vmem:[#allocation2 + $0x440] sm:$0xff]
    %v1236 = vld [vmem:[#allocation2 + $0x448] sm:$0xff]
    %v1237 = vld [vmem:[#allocation2 + $0x450] sm:$0xff]
    %v1238 = vld [vmem:[#allocation2 + $0x458] sm:$0xff]
    %v1239 = vld [vmem:[#allocation2 + $0x460] sm:$0xff]
    %v1240 = vld [vmem:[#allocation2 + $0x468] sm:$0xff]
    %v1241 = vld [vmem:[#allocation2 + $0x470] sm:$0xff]
    %v1242 = vld [vmem:[#allocation2 + $0x478] sm:$0xff]
    %v1243 = vld [vmem:[#allocation2 + $0x480] sm:$0xff]
    %v1244 = vld [vmem:[#allocation2 + $0x488] sm:$0xff]
    %v1245 = vld [vmem:[#allocation2 + $0x490] sm:$0xff]
    %v1246 = vld [vmem:[#allocation2 + $0x498] sm:$0xff]
    %v1247 = vld [vmem:[#allocation2 + $0x4a0] sm:$0xff]
    %v1248 = vld [vmem:[#allocation2 + $0x4a8] sm:$0xff]
    %v1249 = vld [vmem:[#allocation2 + $0x4b0] sm:$0xff]
    %v1250 = vld [vmem:[#allocation2 + $0x4b8] sm:$0xff]
    %v1251 = vld [vmem:[#allocation2 + $0x4c0] sm:$0xff]
    %v1252 = vld [vmem:[#allocation2 + $0x4c8] sm:$0xff]
    %v1253 = vld [vmem:[#allocation2 + $0x4d0] sm:$0xff]
    %v1254 = vld [vmem:[#allocation2 + $0x4d8] sm:$0xff]
    %v1255 = vld [vmem:[#allocation2 + $0x4e0] sm:$0xff]
    %v1256 = vld [vmem:[#allocation2 + $0x4e8] sm:$0xff]
    %v1257 = vld [vmem:[#allocation2 + $0x4f0] sm:$0xff]
    %v1258 = vld [vmem:[#allocation2 + $0x4f8] sm:$0xff]
    %v1259 = vld [vmem:[#allocation2 + $0x500] sm:$0xff]
    %v1260 = vld [vmem:[#allocation2 + $0x508] sm:$0xff]
    %v1261 = vld [vmem:[#allocation2 + $0x510] sm:$0xff]
    %v1262 = vld [vmem:[#allocation2 + $0x518] sm:$0xff]
    %v1263 = vld [vmem:[#allocation2 + $0x520] sm:$0xff]
    %v1264 = vld [vmem:[#allocation2 + $0x528] sm:$0xff]
    %v1265 = vld [vmem:[#allocation2 + $0x530] sm:$0xff]
    %v1266 = vld [vmem:[#allocation2 + $0x538] sm:$0xff]
    %v1267 = vld [vmem:[#allocation2 + $0x540] sm:$0xff]
    %v1268 = vld [vmem:[#allocation2 + $0x548] sm:$0xff]
    %v1269 = vld [vmem:[#allocation2 + $0x550] sm:$0xff]
    %v1270 = vld [vmem:[#allocation2 + $0x558] sm:$0xff]
    %v1271 = vld [vmem:[#allocation2 + $0x560] sm:$0xff]
    %v1272 = vld [vmem:[#allocation2 + $0x568] sm:$0xff]
    %v1273 = vld [vmem:[#allocation2 + $0x570] sm:$0xff]
    %v1274 = vld [vmem:[#allocation2 + $0x578] sm:$0xff]
    %v1275 = vld [vmem:[#allocation2 + $0x580] sm:$0xff]
    %v1276 = vld [vmem:[#allocation2 + $0x588] sm:$0xff]
    %v1277 = vld [vmem:[#allocation2 + $0x590] sm:$0xff]
    %v1278 = vld [vmem:[#allocation2 + $0x598] sm:$0xff]
    %v1279 = vld [vmem:[#allocation2 + $0x5a0] sm:$0xff]
    %v1280 = vld [vmem:[#allocation2 + $0x5a8] sm:$0xff]
    %v1281 = vld [vmem:[#allocation2 + $0x5b0] sm:$0xff]
    %v1282 = vld [vmem:[#allocation2 + $0x5b8] sm:$0xff]
    %v1283 = vld [vmem:[#allocation2 + $0x5c0] sm:$0xff]
    %v1284 = vld [vmem:[#allocation2 + $0x5c8] sm:$0xff]
    %v1285 = vld [vmem:[#allocation2 + $0x5d0] sm:$0xff]
    %v1286 = vld [vmem:[#allocation2 + $0x5d8] sm:$0xff]
    %v1287 = vld [vmem:[#allocation2 + $0x5e0] sm:$0xff]
    %v1288 = vld [vmem:[#allocation2 + $0x5e8] sm:$0xff]
    %v1289 = vld [vmem:[#allocation2 + $0x5f0] sm:$0xff]
    %v1290 = vld [vmem:[#allocation2 + $0x5f8] sm:$0xff]
    %v1293 = vunpack.c.l.b16 %v1097
    %v1294 = vunpack.c.h.b16 %v1097
    %v1295 = vunpack.c.l.b16 %v1098
    %v1296 = vunpack.c.h.b16 %v1098
    %v1297 = vpack.c.b16 %v1295, %v1293
    %v1298 = vpack.c.b16 %v1296, %v1294
    %v1492 = vunpack.c.l.b16 %v1099
    %v1493 = vunpack.c.h.b16 %v1099
    %v1494 = vunpack.c.l.b16 %v1100
    %v1495 = vunpack.c.h.b16 %v1100
    %v1496 = vunpack.c.l.b16 %v1101
    %v1497 = vunpack.c.h.b16 %v1101
    %v1498 = vunpack.c.l.b16 %v1102
    %v1499 = vunpack.c.h.b16 %v1102
    %v1500 = vunpack.c.l.b16 %v1103
    %v1501 = vunpack.c.h.b16 %v1103
    %v1502 = vunpack.c.l.b16 %v1104
    %v1503 = vunpack.c.h.b16 %v1104
    %v1504 = vunpack.c.l.b16 %v1105
    %v1505 = vunpack.c.h.b16 %v1105
    %v1506 = vunpack.c.l.b16 %v1106
    %v1507 = vunpack.c.h.b16 %v1106
    %v1508 = vunpack.c.l.b16 %v1107
    %v1509 = vunpack.c.h.b16 %v1107
    %v1510 = vunpack.c.l.b16 %v1108
    %v1511 = vunpack.c.h.b16 %v1108
    %v1512 = vunpack.c.l.b16 %v1109
    %v1513 = vunpack.c.h.b16 %v1109
    %v1514 = vunpack.c.l.b16 %v1110
    %v1515 = vunpack.c.h.b16 %v1110
    %v1516 = vunpack.c.l.b16 %v1111
    %v1517 = vunpack.c.h.b16 %v1111
    %v1518 = vunpack.c.l.b16 %v1112
    %v1519 = vunpack.c.h.b16 %v1112
    %v1520 = vunpack.c.l.b16 %v1113
    %v1521 = vunpack.c.h.b16 %v1113
    %v1522 = vunpack.c.l.b16 %v1114
    %v1523 = vunpack.c.h.b16 %v1114
    %v1524 = vunpack.c.l.b16 %v1115
    %v1525 = vunpack.c.h.b16 %v1115
    %v1526 = vunpack.c.l.b16 %v1116
    %v1527 = vunpack.c.h.b16 %v1116
    %v1528 = vunpack.c.l.b16 %v1117
    %v1529 = vunpack.c.h.b16 %v1117
    %v1530 = vunpack.c.l.b16 %v1118
    %v1531 = vunpack.c.h.b16 %v1118
    %v1532 = vunpack.c.l.b16 %v1119
    %v1533 = vunpack.c.h.b16 %v1119
    %v1534 = vunpack.c.l.b16 %v1120
    %v1535 = vunpack.c.h.b16 %v1120
    %v1536 = vunpack.c.l.b16 %v1121
    %v1537 = vunpack.c.h.b16 %v1121
    %v1538 = vunpack.c.l.b16 %v1122
    %v1539 = vunpack.c.h.b16 %v1122
    %v1540 = vunpack.c.l.b16 %v1123
    %v1541 = vunpack.c.h.b16 %v1123
    %v1542 = vunpack.c.l.b16 %v1124
    %v1543 = vunpack.c.h.b16 %v1124
    %v1544 = vunpack.c.l.b16 %v1125
    %v1545 = vunpack.c.h.b16 %v1125
    %v1546 = vunpack.c.l.b16 %v1126
    %v1547 = vunpack.c.h.b16 %v1126
    %v1548 = vunpack.c.l.b16 %v1127
    %v1549 = vunpack.c.h.b16 %v1127
    %v1550 = vunpack.c.l.b16 %v1128
    %v1551 = vunpack.c.h.b16 %v1128
    %v1552 = vunpack.c.l.b16 %v1129
    %v1553 = vunpack.c.h.b16 %v1129
    %v1554 = vunpack.c.l.b16 %v1130
    %v1555 = vunpack.c.h.b16 %v1130
    %v1556 = vunpack.c.l.b16 %v1131
    %v1557 = vunpack.c.h.b16 %v1131
    %v1558 = vunpack.c.l.b16 %v1132
    %v1559 = vunpack.c.h.b16 %v1132
    %v1560 = vunpack.c.l.b16 %v1133
    %v1561 = vunpack.c.h.b16 %v1133
    %v1562 = vunpack.c.l.b16 %v1134
    %v1563 = vunpack.c.h.b16 %v1134
    %v1564 = vunpack.c.l.b16 %v1135
    %v1565 = vunpack.c.h.b16 %v1135
    %v1566 = vunpack.c.l.b16 %v1136
    %v1567 = vunpack.c.h.b16 %v1136
    %v1568 = vunpack.c.l.b16 %v1137
    %v1569 = vunpack.c.h.b16 %v1137
    %v1570 = vunpack.c.l.b16 %v1138
    %v1571 = vunpack.c.h.b16 %v1138
    %v1572 = vunpack.c.l.b16 %v1139
    %v1573 = vunpack.c.h.b16 %v1139
    %v1574 = vunpack.c.l.b16 %v1140
    %v1575 = vunpack.c.h.b16 %v1140
    %v1576 = vunpack.c.l.b16 %v1141
    %v1577 = vunpack.c.h.b16 %v1141
    %v1578 = vunpack.c.l.b16 %v1142
    %v1579 = vunpack.c.h.b16 %v1142
    %v1580 = vunpack.c.l.b16 %v1143
    %v1581 = vunpack.c.h.b16 %v1143
    %v1582 = vunpack.c.l.b16 %v1144
    %v1583 = vunpack.c.h.b16 %v1144
    %v1584 = vunpack.c.l.b16 %v1145
    %v1585 = vunpack.c.h.b16 %v1145
    %v1586 = vunpack.c.l.b16 %v1146
    %v1587 = vunpack.c.h.b16 %v1146
    %v1588 = vunpack.c.l.b16 %v1147
    %v1589 = vunpack.c.h.b16 %v1147
    %v1590 = vunpack.c.l.b16 %v1148
    %v1591 = vunpack.c.h.b16 %v1148
    %v1592 = vunpack.c.l.b16 %v1149
    %v1593 = vunpack.c.h.b16 %v1149
    %v1594 = vunpack.c.l.b16 %v1150
    %v1595 = vunpack.c.h.b16 %v1150
    %v1596 = vunpack.c.l.b16 %v1151
    %v1597 = vunpack.c.h.b16 %v1151
    %v1598 = vunpack.c.l.b16 %v1152
    %v1599 = vunpack.c.h.b16 %v1152
    %v1600 = vunpack.c.l.b16 %v1153
    %v1601 = vunpack.c.h.b16 %v1153
    %v1602 = vunpack.c.l.b16 %v1154
    %v1603 = vunpack.c.h.b16 %v1154
    %v1604 = vunpack.c.l.b16 %v1155
    %v1605 = vunpack.c.h.b16 %v1155
    %v1606 = vunpack.c.l.b16 %v1156
    %v1607 = vunpack.c.h.b16 %v1156
    %v1608 = vunpack.c.l.b16 %v1157
    %v1609 = vunpack.c.h.b16 %v1157
    %v1610 = vunpack.c.l.b16 %v1158
    %v1611 = vunpack.c.h.b16 %v1158
    %v1612 = vunpack.c.l.b16 %v1159
    %v1613 = vunpack.c.h.b16 %v1159
    %v1614 = vunpack.c.l.b16 %v1160
    %v1615 = vunpack.c.h.b16 %v1160
    %v1616 = vunpack.c.l.b16 %v1161
    %v1617 = vunpack.c.h.b16 %v1161
    %v1618 = vunpack.c.l.b16 %v1162
    %v1619 = vunpack.c.h.b16 %v1162
    %v1620 = vunpack.c.l.b16 %v1163
    %v1621 = vunpack.c.h.b16 %v1163
    %v1622 = vunpack.c.l.b16 %v1164
    %v1623 = vunpack.c.h.b16 %v1164
    %v1624 = vunpack.c.l.b16 %v1165
    %v1625 = vunpack.c.h.b16 %v1165
    %v1626 = vunpack.c.l.b16 %v1166
    %v1627 = vunpack.c.h.b16 %v1166
    %v1628 = vunpack.c.l.b16 %v1167
    %v1629 = vunpack.c.h.b16 %v1167
    %v1630 = vunpack.c.l.b16 %v1168
    %v1631 = vunpack.c.h.b16 %v1168
    %v1632 = vunpack.c.l.b16 %v1169
    %v1633 = vunpack.c.h.b16 %v1169
    %v1634 = vunpack.c.l.b16 %v1170
    %v1635 = vunpack.c.h.b16 %v1170
    %v1636 = vunpack.c.l.b16 %v1171
    %v1637 = vunpack.c.h.b16 %v1171
    %v1638 = vunpack.c.l.b16 %v1172
    %v1639 = vunpack.c.h.b16 %v1172
    %v1640 = vunpack.c.l.b16 %v1173
    %v1641 = vunpack.c.h.b16 %v1173
    %v1642 = vunpack.c.l.b16 %v1174
    %v1643 = vunpack.c.h.b16 %v1174
    %v1644 = vunpack.c.l.b16 %v1175
    %v1645 = vunpack.c.h.b16 %v1175
    %v1646 = vunpack.c.l.b16 %v1176
    %v1647 = vunpack.c.h.b16 %v1176
    %v1648 = vunpack.c.l.b16 %v1177
    %v1649 = vunpack.c.h.b16 %v1177
    %v1650 = vunpack.c.l.b16 %v1178
    %v1651 = vunpack.c.h.b16 %v1178
    %v1652 = vunpack.c.l.b16 %v1179
    %v1653 = vunpack.c.h.b16 %v1179
    %v1654 = vunpack.c.l.b16 %v1180
    %v1655 = vunpack.c.h.b16 %v1180
    %v1656 = vunpack.c.l.b16 %v1181
    %v1657 = vunpack.c.h.b16 %v1181
    %v1658 = vunpack.c.l.b16 %v1182
    %v1659 = vunpack.c.h.b16 %v1182
    %v1660 = vunpack.c.l.b16 %v1183
    %v1661 = vunpack.c.h.b16 %v1183
    %v1662 = vunpack.c.l.b16 %v1184
    %v1663 = vunpack.c.h.b16 %v1184
    %v1664 = vunpack.c.l.b16 %v1185
    %v1665 = vunpack.c.h.b16 %v1185
    %v1666 = vunpack.c.l.b16 %v1186
    %v1667 = vunpack.c.h.b16 %v1186
    %v1668 = vunpack.c.l.b16 %v1187
    %v1669 = vunpack.c.h.b16 %v1187
    %v1670 = vunpack.c.l.b16 %v1188
    %v1671 = vunpack.c.h.b16 %v1188
    %v1672 = vunpack.c.l.b16 %v1189
    %v1673 = vunpack.c.h.b16 %v1189
    %v1674 = vunpack.c.l.b16 %v1190
    %v1675 = vunpack.c.h.b16 %v1190
    %v1676 = vunpack.c.l.b16 %v1191
    %v1677 = vunpack.c.h.b16 %v1191
    %v1678 = vunpack.c.l.b16 %v1192
    %v1679 = vunpack.c.h.b16 %v1192
    %v1680 = vunpack.c.l.b16 %v1193
    %v1681 = vunpack.c.h.b16 %v1193
    %v1682 = vunpack.c.l.b16 %v1194
    %v1683 = vunpack.c.h.b16 %v1194
    %v1684 = vunpack.c.l.b16 %v1195
    %v1685 = vunpack.c.h.b16 %v1195
    %v1686 = vunpack.c.l.b16 %v1196
    %v1687 = vunpack.c.h.b16 %v1196
    %v1688 = vunpack.c.l.b16 %v1197
    %v1689 = vunpack.c.h.b16 %v1197
    %v1690 = vunpack.c.l.b16 %v1198
    %v1691 = vunpack.c.h.b16 %v1198
    %v1692 = vunpack.c.l.b16 %v1199
    %v1693 = vunpack.c.h.b16 %v1199
    %v1694 = vunpack.c.l.b16 %v1200
    %v1695 = vunpack.c.h.b16 %v1200
    %v1696 = vunpack.c.l.b16 %v1201
    %v1697 = vunpack.c.h.b16 %v1201
    %v1698 = vunpack.c.l.b16 %v1202
    %v1699 = vunpack.c.h.b16 %v1202
    %v1700 = vunpack.c.l.b16 %v1203
    %v1701 = vunpack.c.h.b16 %v1203
    %v1702 = vunpack.c.l.b16 %v1204
    %v1703 = vunpack.c.h.b16 %v1204
    %v1704 = vunpack.c.l.b16 %v1205
    %v1705 = vunpack.c.h.b16 %v1205
    %v1706 = vunpack.c.l.b16 %v1206
    %v1707 = vunpack.c.h.b16 %v1206
    %v1708 = vunpack.c.l.b16 %v1207
    %v1709 = vunpack.c.h.b16 %v1207
    %v1710 = vunpack.c.l.b16 %v1208
    %v1711 = vunpack.c.h.b16 %v1208
    %v1712 = vunpack.c.l.b16 %v1209
    %v1713 = vunpack.c.h.b16 %v1209
    %v1714 = vunpack.c.l.b16 %v1210
    %v1715 = vunpack.c.h.b16 %v1210
    %v1716 = vunpack.c.l.b16 %v1211
    %v1717 = vunpack.c.h.b16 %v1211
    %v1718 = vunpack.c.l.b16 %v1212
    %v1719 = vunpack.c.h.b16 %v1212
    %v1720 = vunpack.c.l.b16 %v1213
    %v1721 = vunpack.c.h.b16 %v1213
    %v1722 = vunpack.c.l.b16 %v1214
    %v1723 = vunpack.c.h.b16 %v1214
    %v1724 = vunpack.c.l.b16 %v1215
    %v1725 = vunpack.c.h.b16 %v1215
    %v1726 = vunpack.c.l.b16 %v1216
    %v1727 = vunpack.c.h.b16 %v1216
    %v1728 = vunpack.c.l.b16 %v1217
    %v1729 = vunpack.c.h.b16 %v1217
    %v1730 = vunpack.c.l.b16 %v1218
    %v1731 = vunpack.c.h.b16 %v1218
    %v1732 = vunpack.c.l.b16 %v1219
    %v1733 = vunpack.c.h.b16 %v1219
    %v1734 = vunpack.c.l.b16 %v1220
    %v1735 = vunpack.c.h.b16 %v1220
    %v1736 = vunpack.c.l.b16 %v1221
    %v1737 = vunpack.c.h.b16 %v1221
    %v1738 = vunpack.c.l.b16 %v1222
    %v1739 = vunpack.c.h.b16 %v1222
    %v1740 = vunpack.c.l.b16 %v1223
    %v1741 = vunpack.c.h.b16 %v1223
    %v1742 = vunpack.c.l.b16 %v1224
    %v1743 = vunpack.c.h.b16 %v1224
    %v1744 = vunpack.c.l.b16 %v1225
    %v1745 = vunpack.c.h.b16 %v1225
    %v1746 = vunpack.c.l.b16 %v1226
    %v1747 = vunpack.c.h.b16 %v1226
    %v1748 = vunpack.c.l.b16 %v1227
    %v1749 = vunpack.c.h.b16 %v1227
    %v1750 = vunpack.c.l.b16 %v1228
    %v1751 = vunpack.c.h.b16 %v1228
    %v1752 = vunpack.c.l.b16 %v1229
    %v1753 = vunpack.c.h.b16 %v1229
    %v1754 = vunpack.c.l.b16 %v1230
    %v1755 = vunpack.c.h.b16 %v1230
    %v1756 = vunpack.c.l.b16 %v1231
    %v1757 = vunpack.c.h.b16 %v1231
    %v1758 = vunpack.c.l.b16 %v1232
    %v1759 = vunpack.c.h.b16 %v1232
    %v1760 = vunpack.c.l.b16 %v1233
    %v1761 = vunpack.c.h.b16 %v1233
    %v1762 = vunpack.c.l.b16 %v1234
    %v1763 = vunpack.c.h.b16 %v1234
    %v1764 = vunpack.c.l.b16 %v1235
    %v1765 = vunpack.c.h.b16 %v1235
    %v1766 = vunpack.c.l.b16 %v1236
    %v1767 = vunpack.c.h.b16 %v1236
    %v1768 = vunpack.c.l.b16 %v1237
    %v1769 = vunpack.c.h.b16 %v1237
    %v1770 = vunpack.c.l.b16 %v1238
    %v1771 = vunpack.c.h.b16 %v1238
    %v1772 = vunpack.c.l.b16 %v1239
    %v1773 = vunpack.c.h.b16 %v1239
    %v1774 = vunpack.c.l.b16 %v1240
    %v1775 = vunpack.c.h.b16 %v1240
    %v1776 = vunpack.c.l.b16 %v1241
    %v1777 = vunpack.c.h.b16 %v1241
    %v1778 = vunpack.c.l.b16 %v1242
    %v1779 = vunpack.c.h.b16 %v1242
    %v1780 = vunpack.c.l.b16 %v1243
    %v1781 = vunpack.c.h.b16 %v1243
    %v1782 = vunpack.c.l.b16 %v1244
    %v1783 = vunpack.c.h.b16 %v1244
    %v1784 = vunpack.c.l.b16 %v1245
    %v1785 = vunpack.c.h.b16 %v1245
    %v1786 = vunpack.c.l.b16 %v1246
    %v1787 = vunpack.c.h.b16 %v1246
    %v1788 = vunpack.c.l.b16 %v1247
    %v1789 = vunpack.c.h.b16 %v1247
    %v1790 = vunpack.c.l.b16 %v1248
    %v1791 = vunpack.c.h.b16 %v1248
    %v1792 = vunpack.c.l.b16 %v1249
    %v1793 = vunpack.c.h.b16 %v1249
    %v1794 = vunpack.c.l.b16 %v1250
    %v1795 = vunpack.c.h.b16 %v1250
    %v1796 = vunpack.c.l.b16 %v1251
    %v1797 = vunpack.c.h.b16 %v1251
    %v1798 = vunpack.c.l.b16 %v1252
    %v1799 = vunpack.c.h.b16 %v1252
    %v1800 = vunpack.c.l.b16 %v1253
    %v1801 = vunpack.c.h.b16 %v1253
    %v1802 = vunpack.c.l.b16 %v1254
    %v1803 = vunpack.c.h.b16 %v1254
    %v1804 = vunpack.c.l.b16 %v1255
    %v1805 = vunpack.c.h.b16 %v1255
    %v1806 = vunpack.c.l.b16 %v1256
    %v1807 = vunpack.c.h.b16 %v1256
    %v1808 = vunpack.c.l.b16 %v1257
    %v1809 = vunpack.c.h.b16 %v1257
    %v1810 = vunpack.c.l.b16 %v1258
    %v1811 = vunpack.c.h.b16 %v1258
    %v1812 = vunpack.c.l.b16 %v1259
    %v1813 = vunpack.c.h.b16 %v1259
    %v1814 = vunpack.c.l.b16 %v1260
    %v1815 = vunpack.c.h.b16 %v1260
    %v1816 = vunpack.c.l.b16 %v1261
    %v1817 = vunpack.c.h.b16 %v1261
    %v1818 = vunpack.c.l.b16 %v1262
    %v1819 = vunpack.c.h.b16 %v1262
    %v1820 = vunpack.c.l.b16 %v1263
    %v1821 = vunpack.c.h.b16 %v1263
    %v1822 = vunpack.c.l.b16 %v1264
    %v1823 = vunpack.c.h.b16 %v1264
    %v1824 = vunpack.c.l.b16 %v1265
    %v1825 = vunpack.c.h.b16 %v1265
    %v1826 = vunpack.c.l.b16 %v1266
    %v1827 = vunpack.c.h.b16 %v1266
    %v1828 = vunpack.c.l.b16 %v1267
    %v1829 = vunpack.c.h.b16 %v1267
    %v1830 = vunpack.c.l.b16 %v1268
    %v1831 = vunpack.c.h.b16 %v1268
    %v1832 = vunpack.c.l.b16 %v1269
    %v1833 = vunpack.c.h.b16 %v1269
    %v1834 = vunpack.c.l.b16 %v1270
    %v1835 = vunpack.c.h.b16 %v1270
    %v1836 = vunpack.c.l.b16 %v1271
    %v1837 = vunpack.c.h.b16 %v1271
    %v1838 = vunpack.c.l.b16 %v1272
    %v1839 = vunpack.c.h.b16 %v1272
    %v1840 = vunpack.c.l.b16 %v1273
    %v1841 = vunpack.c.h.b16 %v1273
    %v1842 = vunpack.c.l.b16 %v1274
    %v1843 = vunpack.c.h.b16 %v1274
    %v1844 = vunpack.c.l.b16 %v1275
    %v1845 = vunpack.c.h.b16 %v1275
    %v1846 = vunpack.c.l.b16 %v1276
    %v1847 = vunpack.c.h.b16 %v1276
    %v1848 = vunpack.c.l.b16 %v1277
    %v1849 = vunpack.c.h.b16 %v1277
    %v1850 = vunpack.c.l.b16 %v1278
    %v1851 = vunpack.c.h.b16 %v1278
    %v1852 = vunpack.c.l.b16 %v1279
    %v1853 = vunpack.c.h.b16 %v1279
    %v1854 = vunpack.c.l.b16 %v1280
    %v1855 = vunpack.c.h.b16 %v1280
    %v1856 = vunpack.c.l.b16 %v1281
    %v1857 = vunpack.c.h.b16 %v1281
    %v1858 = vunpack.c.l.b16 %v1282
    %v1859 = vunpack.c.h.b16 %v1282
    %v1860 = vunpack.c.l.b16 %v1283
    %v1861 = vunpack.c.h.b16 %v1283
    %v1862 = vunpack.c.l.b16 %v1284
    %v1863 = vunpack.c.h.b16 %v1284
    %v1864 = vunpack.c.l.b16 %v1285
    %v1865 = vunpack.c.h.b16 %v1285
    %v1866 = vunpack.c.l.b16 %v1286
    %v1867 = vunpack.c.h.b16 %v1286
    %v1868 = vunpack.c.l.b16 %v1287
    %v1869 = vunpack.c.h.b16 %v1287
    %v1870 = vunpack.c.l.b16 %v1288
    %v1871 = vunpack.c.h.b16 %v1288
    %v1872 = vunpack.c.l.b16 %v1289
    %v1873 = vunpack.c.h.b16 %v1289
    %v1874 = vunpack.c.l.b16 %v1290
    %v1875 = vunpack.c.h.b16 %v1290
    %v1876 = vpack.c.b16 %v1508, %v1492
    %v1877 = vpack.c.b16 %v1509, %v1493
    %v1878 = vpack.c.b16 %v1510, %v1494
    %v1879 = vpack.c.b16 %v1511, %v1495
    %v1880 = vpack.c.b16 %v1512, %v1496
    %v1881 = vpack.c.b16 %v1513, %v1497
    %v1882 = vpack.c.b16 %v1514, %v1498
    %v1883 = vpack.c.b16 %v1515, %v1499
    %v1884 = vpack.c.b16 %v1516, %v1500
    %v1885 = vpack.c.b16 %v1517, %v1501
    %v1886 = vpack.c.b16 %v1518, %v1502
    %v1887 = vpack.c.b16 %v1519, %v1503
    %v1888 = vpack.c.b16 %v1520, %v1504
    %v1889 = vpack.c.b16 %v1521, %v1505
    %v1890 = vpack.c.b16 %v1522, %v1506
    %v1891 = vpack.c.b16 %v1523, %v1507
    %v1892 = vpack.c.b16 %v1540, %v1524
    %v1893 = vpack.c.b16 %v1541, %v1525
    %v1894 = vpack.c.b16 %v1542, %v1526
    %v1895 = vpack.c.b16 %v1543, %v1527
    %v1896 = vpack.c.b16 %v1544, %v1528
    %v1897 = vpack.c.b16 %v1545, %v1529
    %v1898 = vpack.c.b16 %v1546, %v1530
    %v1899 = vpack.c.b16 %v1547, %v1531
    %v1900 = vpack.c.b16 %v1548, %v1532
    %v1901 = vpack.c.b16 %v1549, %v1533
    %v1902 = vpack.c.b16 %v1550, %v1534
    %v1903 = vpack.c.b16 %v1551, %v1535
    %v1904 = vpack.c.b16 %v1552, %v1536
    %v1905 = vpack.c.b16 %v1553, %v1537
    %v1906 = vpack.c.b16 %v1554, %v1538
    %v1907 = vpack.c.b16 %v1555, %v1539
    %v1908 = vpack.c.b16 %v1572, %v1556
    %v1909 = vpack.c.b16 %v1573, %v1557
    %v1910 = vpack.c.b16 %v1574, %v1558
    %v1911 = vpack.c.b16 %v1575, %v1559
    %v1912 = vpack.c.b16 %v1576, %v1560
    %v1913 = vpack.c.b16 %v1577, %v1561
    %v1914 = vpack.c.b16 %v1578, %v1562
    %v1915 = vpack.c.b16 %v1579, %v1563
    %v1916 = vpack.c.b16 %v1580, %v1564
    %v1917 = vpack.c.b16 %v1581, %v1565
    %v1918 = vpack.c.b16 %v1582, %v1566
    %v1919 = vpack.c.b16 %v1583, %v1567
    %v1920 = vpack.c.b16 %v1584, %v1568
    %v1921 = vpack.c.b16 %v1585, %v1569
    %v1922 = vpack.c.b16 %v1586, %v1570
    %v1923 = vpack.c.b16 %v1587, %v1571
    %v1924 = vpack.c.b16 %v1604, %v1588
    %v1925 = vpack.c.b16 %v1605, %v1589
    %v1926 = vpack.c.b16 %v1606, %v1590
    %v1927 = vpack.c.b16 %v1607, %v1591
    %v1928 = vpack.c.b16 %v1608, %v1592
    %v1929 = vpack.c.b16 %v1609, %v1593
    %v1930 = vpack.c.b16 %v1610, %v1594
    %v1931 = vpack.c.b16 %v1611, %v1595
    %v1932 = vpack.c.b16 %v1612, %v1596
    %v1933 = vpack.c.b16 %v1613, %v1597
    %v1934 = vpack.c.b16 %v1614, %v1598
    %v1935 = vpack.c.b16 %v1615, %v1599
    %v1936 = vpack.c.b16 %v1616, %v1600
    %v1937 = vpack.c.b16 %v1617, %v1601
    %v1938 = vpack.c.b16 %v1618, %v1602
    %v1939 = vpack.c.b16 %v1619, %v1603
    %v1940 = vpack.c.b16 %v1636, %v1620
    %v1941 = vpack.c.b16 %v1637, %v1621
    %v1942 = vpack.c.b16 %v1638, %v1622
    %v1943 = vpack.c.b16 %v1639, %v1623
    %v1944 = vpack.c.b16 %v1640, %v1624
    %v1945 = vpack.c.b16 %v1641, %v1625
    %v1946 = vpack.c.b16 %v1642, %v1626
    %v1947 = vpack.c.b16 %v1643, %v1627
    %v1948 = vpack.c.b16 %v1644, %v1628
    %v1949 = vpack.c.b16 %v1645, %v1629
    %v1950 = vpack.c.b16 %v1646, %v1630
    %v1951 = vpack.c.b16 %v1647, %v1631
    %v1952 = vpack.c.b16 %v1648, %v1632
    %v1953 = vpack.c.b16 %v1649, %v1633
    %v1954 = vpack.c.b16 %v1650, %v1634
    %v1955 = vpack.c.b16 %v1651, %v1635
    %v1956 = vpack.c.b16 %v1668, %v1652
    %v1957 = vpack.c.b16 %v1669, %v1653
    %v1958 = vpack.c.b16 %v1670, %v1654
    %v1959 = vpack.c.b16 %v1671, %v1655
    %v1960 = vpack.c.b16 %v1672, %v1656
    %v1961 = vpack.c.b16 %v1673, %v1657
    %v1962 = vpack.c.b16 %v1674, %v1658
    %v1963 = vpack.c.b16 %v1675, %v1659
    %v1964 = vpack.c.b16 %v1676, %v1660
    %v1965 = vpack.c.b16 %v1677, %v1661
    %v1966 = vpack.c.b16 %v1678, %v1662
    %v1967 = vpack.c.b16 %v1679, %v1663
    %v1968 = vpack.c.b16 %v1680, %v1664
    %v1969 = vpack.c.b16 %v1681, %v1665
    %v1970 = vpack.c.b16 %v1682, %v1666
    %v1971 = vpack.c.b16 %v1683, %v1667
    %v1972 = vpack.c.b16 %v1700, %v1684
    %v1973 = vpack.c.b16 %v1701, %v1685
    %v1974 = vpack.c.b16 %v1702, %v1686
    %v1975 = vpack.c.b16 %v1703, %v1687
    %v1976 = vpack.c.b16 %v1704, %v1688
    %v1977 = vpack.c.b16 %v1705, %v1689
    %v1978 = vpack.c.b16 %v1706, %v1690
    %v1979 = vpack.c.b16 %v1707, %v1691
    %v1980 = vpack.c.b16 %v1708, %v1692
    %v1981 = vpack.c.b16 %v1709, %v1693
    %v1982 = vpack.c.b16 %v1710, %v1694
    %v1983 = vpack.c.b16 %v1711, %v1695
    %v1984 = vpack.c.b16 %v1712, %v1696
    %v1985 = vpack.c.b16 %v1713, %v1697
    %v1986 = vpack.c.b16 %v1714, %v1698
    %v1987 = vpack.c.b16 %v1715, %v1699
    %v1988 = vpack.c.b16 %v1732, %v1716
    %v1989 = vpack.c.b16 %v1733, %v1717
    %v1990 = vpack.c.b16 %v1734, %v1718
    %v1991 = vpack.c.b16 %v1735, %v1719
    %v1992 = vpack.c.b16 %v1736, %v1720
    %v1993 = vpack.c.b16 %v1737, %v1721
    %v1994 = vpack.c.b16 %v1738, %v1722
    %v1995 = vpack.c.b16 %v1739, %v1723
    %v1996 = vpack.c.b16 %v1740, %v1724
    %v1997 = vpack.c.b16 %v1741, %v1725
    %v1998 = vpack.c.b16 %v1742, %v1726
    %v1999 = vpack.c.b16 %v1743, %v1727
    %v2000 = vpack.c.b16 %v1744, %v1728
    %v2001 = vpack.c.b16 %v1745, %v1729
    %v2002 = vpack.c.b16 %v1746, %v1730
    %v2003 = vpack.c.b16 %v1747, %v1731
    %v2004 = vpack.c.b16 %v1764, %v1748
    %v2005 = vpack.c.b16 %v1765, %v1749
    %v2006 = vpack.c.b16 %v1766, %v1750
    %v2007 = vpack.c.b16 %v1767, %v1751
    %v2008 = vpack.c.b16 %v1768, %v1752
    %v2009 = vpack.c.b16 %v1769, %v1753
    %v2010 = vpack.c.b16 %v1770, %v1754
    %v2011 = vpack.c.b16 %v1771, %v1755
    %v2012 = vpack.c.b16 %v1772, %v1756
    %v2013 = vpack.c.b16 %v1773, %v1757
    %v2014 = vpack.c.b16 %v1774, %v1758
    %v2015 = vpack.c.b16 %v1775, %v1759
    %v2016 = vpack.c.b16 %v1776, %v1760
    %v2017 = vpack.c.b16 %v1777, %v1761
    %v2018 = vpack.c.b16 %v1778, %v1762
    %v2019 = vpack.c.b16 %v1779, %v1763
    %v2020 = vpack.c.b16 %v1796, %v1780
    %v2021 = vpack.c.b16 %v1797, %v1781
    %v2022 = vpack.c.b16 %v1798, %v1782
    %v2023 = vpack.c.b16 %v1799, %v1783
    %v2024 = vpack.c.b16 %v1800, %v1784
    %v2025 = vpack.c.b16 %v1801, %v1785
    %v2026 = vpack.c.b16 %v1802, %v1786
    %v2027 = vpack.c.b16 %v1803, %v1787
    %v2028 = vpack.c.b16 %v1804, %v1788
    %v2029 = vpack.c.b16 %v1805, %v1789
    %v2030 = vpack.c.b16 %v1806, %v1790
    %v2031 = vpack.c.b16 %v1807, %v1791
    %v2032 = vpack.c.b16 %v1808, %v1792
    %v2033 = vpack.c.b16 %v1809, %v1793
    %v2034 = vpack.c.b16 %v1810, %v1794
    %v2035 = vpack.c.b16 %v1811, %v1795
    %v2036 = vpack.c.b16 %v1828, %v1812
    %v2037 = vpack.c.b16 %v1829, %v1813
    %v2038 = vpack.c.b16 %v1830, %v1814
    %v2039 = vpack.c.b16 %v1831, %v1815
    %v2040 = vpack.c.b16 %v1832, %v1816
    %v2041 = vpack.c.b16 %v1833, %v1817
    %v2042 = vpack.c.b16 %v1834, %v1818
    %v2043 = vpack.c.b16 %v1835, %v1819
    %v2044 = vpack.c.b16 %v1836, %v1820
    %v2045 = vpack.c.b16 %v1837, %v1821
    %v2046 = vpack.c.b16 %v1838, %v1822
    %v2047 = vpack.c.b16 %v1839, %v1823
    %v2048 = vpack.c.b16 %v1840, %v1824
    %v2049 = vpack.c.b16 %v1841, %v1825
    %v2050 = vpack.c.b16 %v1842, %v1826
    %v2051 = vpack.c.b16 %v1843, %v1827
    %v2052 = vpack.c.b16 %v1860, %v1844
    %v2053 = vpack.c.b16 %v1861, %v1845
    %v2054 = vpack.c.b16 %v1862, %v1846
    %v2055 = vpack.c.b16 %v1863, %v1847
    %v2056 = vpack.c.b16 %v1864, %v1848
    %v2057 = vpack.c.b16 %v1865, %v1849
    %v2058 = vpack.c.b16 %v1866, %v1850
    %v2059 = vpack.c.b16 %v1867, %v1851
    %v2060 = vpack.c.b16 %v1868, %v1852
    %v2061 = vpack.c.b16 %v1869, %v1853
    %v2062 = vpack.c.b16 %v1870, %v1854
    %v2063 = vpack.c.b16 %v1871, %v1855
    %v2064 = vpack.c.b16 %v1872, %v1856
    %v2065 = vpack.c.b16 %v1873, %v1857
    %v2066 = vpack.c.b16 %v1874, %v1858
    %v2067 = vpack.c.b16 %v1875, %v1859
    %v2261 = vsel %vm300, %v1298, 0
    %2263 = vmatpush.bf16.msra.mxu0 %v1988
    %2264 = vmatpush.bf16.msra.mxu0 %v1972
    %2265 = vmatpush.bf16.msra.mxu0 %v1956
    %2266 = vmatpush.bf16.msra.mxu0 %v1940
    %2267 = vmatpush.bf16.msra.mxu0 %v1924
    %2268 = vmatpush.bf16.msra.mxu0 %v1908
    %2269 = vmatpush.bf16.msra.mxu0 %v1892
    %2270 = vmatpush.bf16.msra.mxu0 %v1876
    %2271 = vmatmul.bf16.gmra.mxu0 %v1297
    %v2272 = vpop.f32.mrf.mxu0
    %v2273 = vadd.f32 0.0, %v2272
    %v2274 = vpop.f32.mrf.mxu0
    %v2275 = vadd.f32 0.0, %v2274
    %2276 = vdwg.mxu0
    %2277 = vmatpush.bf16.msra.mxu0 0
    %2278 = vmatpush.bf16.msra.mxu0 0
    %2279 = vmatpush.bf16.msra.mxu0 0
    %2280 = vmatpush.bf16.msra.mxu0 0
    %2281 = vmatpush.bf16.msra.mxu0 %v2052
    %2282 = vmatpush.bf16.msra.mxu0 %v2036
    %2283 = vmatpush.bf16.msra.mxu0 %v2020
    %2284 = vmatpush.bf16.msra.mxu0 %v2004
    %2285 = vmatmul.bf16.gmra.mxu0 %v2261
    %v2286 = vpop.f32.mrf.mxu0
    %v2287 = vadd.f32 %v2273, %v2286
    %v2288 = vpop.f32.mrf.mxu0
    %v2289 = vadd.f32 %v2275, %v2288
    %2290 = vdwg.mxu0
    %2291 = vmatpush.bf16.msra.mxu0 %v1989
    %2292 = vmatpush.bf16.msra.mxu0 %v1973
    %2293 = vmatpush.bf16.msra.mxu0 %v1957
    %2294 = vmatpush.bf16.msra.mxu0 %v1941
    %2295 = vmatpush.bf16.msra.mxu0 %v1925
    %2296 = vmatpush.bf16.msra.mxu0 %v1909
    %2297 = vmatpush.bf16.msra.mxu0 %v1893
    %2298 = vmatpush.bf16.msra.mxu0 %v1877
    %2299 = vmatmul.bf16.gmra.mxu0 %v1297
    %v2300 = vpop.f32.mrf.mxu0
    %v2301 = vadd.f32 0.0, %v2300
    %v2302 = vpop.f32.mrf.mxu0
    %v2303 = vadd.f32 0.0, %v2302
    %2304 = vdwg.mxu0
    %2305 = vmatpush.bf16.msra.mxu0 0
    %2306 = vmatpush.bf16.msra.mxu0 0
    %2307 = vmatpush.bf16.msra.mxu0 0
    %2308 = vmatpush.bf16.msra.mxu0 0
    %2309 = vmatpush.bf16.msra.mxu0 %v2053
    %2310 = vmatpush.bf16.msra.mxu0 %v2037
    %2311 = vmatpush.bf16.msra.mxu0 %v2021
    %2312 = vmatpush.bf16.msra.mxu0 %v2005
    %2313 = vmatmul.bf16.gmra.mxu0 %v2261
    %v2314 = vpop.f32.mrf.mxu0
    %v2315 = vadd.f32 %v2301, %v2314
    %v2316 = vpop.f32.mrf.mxu0
    %v2317 = vadd.f32 %v2303, %v2316
    %2318 = vdwg.mxu0
    %2319 = vmatpush.bf16.msra.mxu0 %v1990
    %2320 = vmatpush.bf16.msra.mxu0 %v1974
    %2321 = vmatpush.bf16.msra.mxu0 %v1958
    %2322 = vmatpush.bf16.msra.mxu0 %v1942
    %2323 = vmatpush.bf16.msra.mxu0 %v1926
    %2324 = vmatpush.bf16.msra.mxu0 %v1910
    %2325 = vmatpush.bf16.msra.mxu0 %v1894
    %2326 = vmatpush.bf16.msra.mxu0 %v1878
    %2327 = vmatmul.bf16.gmra.mxu0 %v1297
    %v2328 = vpop.f32.mrf.mxu0
    %v2329 = vadd.f32 0.0, %v2328
    %v2330 = vpop.f32.mrf.mxu0
    %v2331 = vadd.f32 0.0, %v2330
    %2332 = vdwg.mxu0
    %2333 = vmatpush.bf16.msra.mxu0 0
    %2334 = vmatpush.bf16.msra.mxu0 0
    %2335 = vmatpush.bf16.msra.mxu0 0
    %2336 = vmatpush.bf16.msra.mxu0 0
    %2337 = vmatpush.bf16.msra.mxu0 %v2054
    %2338 = vmatpush.bf16.msra.mxu0 %v2038
    %2339 = vmatpush.bf16.msra.mxu0 %v2022
    %2340 = vmatpush.bf16.msra.mxu0 %v2006
    %2341 = vmatmul.bf16.gmra.mxu0 %v2261
    %v2342 = vpop.f32.mrf.mxu0
    %v2343 = vadd.f32 %v2329, %v2342
    %v2344 = vpop.f32.mrf.mxu0
    %v2345 = vadd.f32 %v2331, %v2344
    %2346 = vdwg.mxu0
    %2347 = vmatpush.bf16.msra.mxu0 %v1991
    %2348 = vmatpush.bf16.msra.mxu0 %v1975
    %2349 = vmatpush.bf16.msra.mxu0 %v1959
    %2350 = vmatpush.bf16.msra.mxu0 %v1943
    %2351 = vmatpush.bf16.msra.mxu0 %v1927
    %2352 = vmatpush.bf16.msra.mxu0 %v1911
    %2353 = vmatpush.bf16.msra.mxu0 %v1895
    %2354 = vmatpush.bf16.msra.mxu0 %v1879
    %2355 = vmatmul.bf16.gmra.mxu0 %v1297
    %v2356 = vpop.f32.mrf.mxu0
    %v2357 = vadd.f32 0.0, %v2356
    %v2358 = vpop.f32.mrf.mxu0
    %v2359 = vadd.f32 0.0, %v2358
    %2360 = vdwg.mxu0
    %2361 = vmatpush.bf16.msra.mxu0 0
    %2362 = vmatpush.bf16.msra.mxu0 0
    %2363 = vmatpush.bf16.msra.mxu0 0
    %2364 = vmatpush.bf16.msra.mxu0 0
    %2365 = vmatpush.bf16.msra.mxu0 %v2055
    %2366 = vmatpush.bf16.msra.mxu0 %v2039
    %2367 = vmatpush.bf16.msra.mxu0 %v2023
    %2368 = vmatpush.bf16.msra.mxu0 %v2007
    %2369 = vmatmul.bf16.gmra.mxu0 %v2261
    %v2370 = vpop.f32.mrf.mxu0
    %v2371 = vadd.f32 %v2357, %v2370
    %v2372 = vpop.f32.mrf.mxu0
    %v2373 = vadd.f32 %v2359, %v2372
    %2374 = vdwg.mxu0
    %2375 = vmatpush.bf16.msra.mxu0 %v1992
    %2376 = vmatpush.bf16.msra.mxu0 %v1976
    %2377 = vmatpush.bf16.msra.mxu0 %v1960
    %2378 = vmatpush.bf16.msra.mxu0 %v1944
    %2379 = vmatpush.bf16.msra.mxu0 %v1928
    %2380 = vmatpush.bf16.msra.mxu0 %v1912
    %2381 = vmatpush.bf16.msra.mxu0 %v1896
    %2382 = vmatpush.bf16.msra.mxu0 %v1880
    %2383 = vmatmul.bf16.gmra.mxu0 %v1297
    %v2384 = vpop.f32.mrf.mxu0
    %v2385 = vadd.f32 0.0, %v2384
    %v2386 = vpop.f32.mrf.mxu0
    %v2387 = vadd.f32 0.0, %v2386
    %2388 = vdwg.mxu0
    %2389 = vmatpush.bf16.msra.mxu0 0
    %2390 = vmatpush.bf16.msra.mxu0 0
    %2391 = vmatpush.bf16.msra.mxu0 0
    %2392 = vmatpush.bf16.msra.mxu0 0
    %2393 = vmatpush.bf16.msra.mxu0 %v2056
    %2394 = vmatpush.bf16.msra.mxu0 %v2040
    %2395 = vmatpush.bf16.msra.mxu0 %v2024
    %2396 = vmatpush.bf16.msra.mxu0 %v2008
    %2397 = vmatmul.bf16.gmra.mxu0 %v2261
    %v2398 = vpop.f32.mrf.mxu0
    %v2399 = vadd.f32 %v2385, %v2398
    %v2400 = vpop.f32.mrf.mxu0
    %v2401 = vadd.f32 %v2387, %v2400
    %2402 = vdwg.mxu0
    %2403 = vmatpush.bf16.msra.mxu0 %v1993
    %2404 = vmatpush.bf16.msra.mxu0 %v1977
    %2405 = vmatpush.bf16.msra.mxu0 %v1961
    %2406 = vmatpush.bf16.msra.mxu0 %v1945
    %2407 = vmatpush.bf16.msra.mxu0 %v1929
    %2408 = vmatpush.bf16.msra.mxu0 %v1913
    %2409 = vmatpush.bf16.msra.mxu0 %v1897
    %2410 = vmatpush.bf16.msra.mxu0 %v1881
    %2411 = vmatmul.bf16.gmra.mxu0 %v1297
    %v2412 = vpop.f32.mrf.mxu0
    %v2413 = vadd.f32 0.0, %v2412
    %v2414 = vpop.f32.mrf.mxu0
    %v2415 = vadd.f32 0.0, %v2414
    %2416 = vdwg.mxu0
    %2417 = vmatpush.bf16.msra.mxu0 0
    %2418 = vmatpush.bf16.msra.mxu0 0
    %2419 = vmatpush.bf16.msra.mxu0 0
    %2420 = vmatpush.bf16.msra.mxu0 0
    %2421 = vmatpush.bf16.msra.mxu0 %v2057
    %2422 = vmatpush.bf16.msra.mxu0 %v2041
    %2423 = vmatpush.bf16.msra.mxu0 %v2025
    %2424 = vmatpush.bf16.msra.mxu0 %v2009
    %2425 = vmatmul.bf16.gmra.mxu0 %v2261
    %v2426 = vpop.f32.mrf.mxu0
    %v2427 = vadd.f32 %v2413, %v2426
    %v2428 = vpop.f32.mrf.mxu0
    %v2429 = vadd.f32 %v2415, %v2428
    %2430 = vdwg.mxu0
    %2431 = vmatpush.bf16.msra.mxu0 %v1994
    %2432 = vmatpush.bf16.msra.mxu0 %v1978
    %2433 = vmatpush.bf16.msra.mxu0 %v1962
    %2434 = vmatpush.bf16.msra.mxu0 %v1946
    %2435 = vmatpush.bf16.msra.mxu0 %v1930
    %2436 = vmatpush.bf16.msra.mxu0 %v1914
    %2437 = vmatpush.bf16.msra.mxu0 %v1898
    %2438 = vmatpush.bf16.msra.mxu0 %v1882
    %2439 = vmatmul.bf16.gmra.mxu0 %v1297
    %v2440 = vpop.f32.mrf.mxu0
    %v2441 = vadd.f32 0.0, %v2440
    %v2442 = vpop.f32.mrf.mxu0
    %v2443 = vadd.f32 0.0, %v2442
    %2444 = vdwg.mxu0
    %2445 = vmatpush.bf16.msra.mxu0 0
    %2446 = vmatpush.bf16.msra.mxu0 0
    %2447 = vmatpush.bf16.msra.mxu0 0
    %2448 = vmatpush.bf16.msra.mxu0 0
    %2449 = vmatpush.bf16.msra.mxu0 %v2058
    %2450 = vmatpush.bf16.msra.mxu0 %v2042
    %2451 = vmatpush.bf16.msra.mxu0 %v2026
    %2452 = vmatpush.bf16.msra.mxu0 %v2010
    %2453 = vmatmul.bf16.gmra.mxu0 %v2261
    %v2454 = vpop.f32.mrf.mxu0
    %v2455 = vadd.f32 %v2441, %v2454
    %v2456 = vpop.f32.mrf.mxu0
    %v2457 = vadd.f32 %v2443, %v2456
    %2458 = vdwg.mxu0
    %2459 = vmatpush.bf16.msra.mxu0 %v1995
    %2460 = vmatpush.bf16.msra.mxu0 %v1979
    %2461 = vmatpush.bf16.msra.mxu0 %v1963
    %2462 = vmatpush.bf16.msra.mxu0 %v1947
    %2463 = vmatpush.bf16.msra.mxu0 %v1931
    %2464 = vmatpush.bf16.msra.mxu0 %v1915
    %2465 = vmatpush.bf16.msra.mxu0 %v1899
    %2466 = vmatpush.bf16.msra.mxu0 %v1883
    %2467 = vmatmul.bf16.gmra.mxu0 %v1297
    %v2468 = vpop.f32.mrf.mxu0
    %v2469 = vadd.f32 0.0, %v2468
    %v2470 = vpop.f32.mrf.mxu0
    %v2471 = vadd.f32 0.0, %v2470
    %2472 = vdwg.mxu0
    %2473 = vmatpush.bf16.msra.mxu0 0
    %2474 = vmatpush.bf16.msra.mxu0 0
    %2475 = vmatpush.bf16.msra.mxu0 0
    %2476 = vmatpush.bf16.msra.mxu0 0
    %2477 = vmatpush.bf16.msra.mxu0 %v2059
    %2478 = vmatpush.bf16.msra.mxu0 %v2043
    %2479 = vmatpush.bf16.msra.mxu0 %v2027
    %2480 = vmatpush.bf16.msra.mxu0 %v2011
    %2481 = vmatmul.bf16.gmra.mxu0 %v2261
    %v2482 = vpop.f32.mrf.mxu0
    %v2483 = vadd.f32 %v2469, %v2482
    %v2484 = vpop.f32.mrf.mxu0
    %v2485 = vadd.f32 %v2471, %v2484
    %2486 = vdwg.mxu0
    %2487 = vmatpush.bf16.msra.mxu0 %v1996
    %2488 = vmatpush.bf16.msra.mxu0 %v1980
    %2489 = vmatpush.bf16.msra.mxu0 %v1964
    %2490 = vmatpush.bf16.msra.mxu0 %v1948
    %2491 = vmatpush.bf16.msra.mxu0 %v1932
    %2492 = vmatpush.bf16.msra.mxu0 %v1916
    %2493 = vmatpush.bf16.msra.mxu0 %v1900
    %2494 = vmatpush.bf16.msra.mxu0 %v1884
    %2495 = vmatmul.bf16.gmra.mxu0 %v1297
    %v2496 = vpop.f32.mrf.mxu0
    %v2497 = vadd.f32 0.0, %v2496
    %v2498 = vpop.f32.mrf.mxu0
    %v2499 = vadd.f32 0.0, %v2498
    %2500 = vdwg.mxu0
    %2501 = vmatpush.bf16.msra.mxu0 0
    %2502 = vmatpush.bf16.msra.mxu0 0
    %2503 = vmatpush.bf16.msra.mxu0 0
    %2504 = vmatpush.bf16.msra.mxu0 0
    %2505 = vmatpush.bf16.msra.mxu0 %v2060
    %2506 = vmatpush.bf16.msra.mxu0 %v2044
    %2507 = vmatpush.bf16.msra.mxu0 %v2028
    %2508 = vmatpush.bf16.msra.mxu0 %v2012
    %2509 = vmatmul.bf16.gmra.mxu0 %v2261
    %v2510 = vpop.f32.mrf.mxu0
    %v2511 = vadd.f32 %v2497, %v2510
    %v2512 = vpop.f32.mrf.mxu0
    %v2513 = vadd.f32 %v2499, %v2512
    %2514 = vdwg.mxu0
    %2515 = vmatpush.bf16.msra.mxu0 %v1997
    %2516 = vmatpush.bf16.msra.mxu0 %v1981
    %2517 = vmatpush.bf16.msra.mxu0 %v1965
    %2518 = vmatpush.bf16.msra.mxu0 %v1949
    %2519 = vmatpush.bf16.msra.mxu0 %v1933
    %2520 = vmatpush.bf16.msra.mxu0 %v1917
    %2521 = vmatpush.bf16.msra.mxu0 %v1901
    %2522 = vmatpush.bf16.msra.mxu0 %v1885
    %2523 = vmatmul.bf16.gmra.mxu0 %v1297
    %v2524 = vpop.f32.mrf.mxu0
    %v2525 = vadd.f32 0.0, %v2524
    %v2526 = vpop.f32.mrf.mxu0
    %v2527 = vadd.f32 0.0, %v2526
    %2528 = vdwg.mxu0
    %2529 = vmatpush.bf16.msra.mxu0 0
    %2530 = vmatpush.bf16.msra.mxu0 0
    %2531 = vmatpush.bf16.msra.mxu0 0
    %2532 = vmatpush.bf16.msra.mxu0 0
    %2533 = vmatpush.bf16.msra.mxu0 %v2061
    %2534 = vmatpush.bf16.msra.mxu0 %v2045
    %2535 = vmatpush.bf16.msra.mxu0 %v2029
    %2536 = vmatpush.bf16.msra.mxu0 %v2013
    %2537 = vmatmul.bf16.gmra.mxu0 %v2261
    %v2538 = vpop.f32.mrf.mxu0
    %v2539 = vadd.f32 %v2525, %v2538
    %v2540 = vpop.f32.mrf.mxu0
    %v2541 = vadd.f32 %v2527, %v2540
    %2542 = vdwg.mxu0
    %2543 = vmatpush.bf16.msra.mxu0 %v1998
    %2544 = vmatpush.bf16.msra.mxu0 %v1982
    %2545 = vmatpush.bf16.msra.mxu0 %v1966
    %2546 = vmatpush.bf16.msra.mxu0 %v1950
    %2547 = vmatpush.bf16.msra.mxu0 %v1934
    %2548 = vmatpush.bf16.msra.mxu0 %v1918
    %2549 = vmatpush.bf16.msra.mxu0 %v1902
    %2550 = vmatpush.bf16.msra.mxu0 %v1886
    %2551 = vmatmul.bf16.gmra.mxu0 %v1297
    %v2552 = vpop.f32.mrf.mxu0
    %v2553 = vadd.f32 0.0, %v2552
    %v2554 = vpop.f32.mrf.mxu0
    %v2555 = vadd.f32 0.0, %v2554
    %2556 = vdwg.mxu0
    %2557 = vmatpush.bf16.msra.mxu0 0
    %2558 = vmatpush.bf16.msra.mxu0 0
    %2559 = vmatpush.bf16.msra.mxu0 0
    %2560 = vmatpush.bf16.msra.mxu0 0
    %2561 = vmatpush.bf16.msra.mxu0 %v2062
    %2562 = vmatpush.bf16.msra.mxu0 %v2046
    %2563 = vmatpush.bf16.msra.mxu0 %v2030
    %2564 = vmatpush.bf16.msra.mxu0 %v2014
    %2565 = vmatmul.bf16.gmra.mxu0 %v2261
    %v2566 = vpop.f32.mrf.mxu0
    %v2567 = vadd.f32 %v2553, %v2566
    %v2568 = vpop.f32.mrf.mxu0
    %v2569 = vadd.f32 %v2555, %v2568
    %2570 = vdwg.mxu0
    %2571 = vmatpush.bf16.msra.mxu0 %v1999
    %2572 = vmatpush.bf16.msra.mxu0 %v1983
    %2573 = vmatpush.bf16.msra.mxu0 %v1967
    %2574 = vmatpush.bf16.msra.mxu0 %v1951
    %2575 = vmatpush.bf16.msra.mxu0 %v1935
    %2576 = vmatpush.bf16.msra.mxu0 %v1919
    %2577 = vmatpush.bf16.msra.mxu0 %v1903
    %2578 = vmatpush.bf16.msra.mxu0 %v1887
    %2579 = vmatmul.bf16.gmra.mxu0 %v1297
    %v2580 = vpop.f32.mrf.mxu0
    %v2581 = vadd.f32 0.0, %v2580
    %v2582 = vpop.f32.mrf.mxu0
    %v2583 = vadd.f32 0.0, %v2582
    %2584 = vdwg.mxu0
    %2585 = vmatpush.bf16.msra.mxu0 0
    %2586 = vmatpush.bf16.msra.mxu0 0
    %2587 = vmatpush.bf16.msra.mxu0 0
    %2588 = vmatpush.bf16.msra.mxu0 0
    %2589 = vmatpush.bf16.msra.mxu0 %v2063
    %2590 = vmatpush.bf16.msra.mxu0 %v2047
    %2591 = vmatpush.bf16.msra.mxu0 %v2031
    %2592 = vmatpush.bf16.msra.mxu0 %v2015
    %2593 = vmatmul.bf16.gmra.mxu0 %v2261
    %v2594 = vpop.f32.mrf.mxu0
    %v2595 = vadd.f32 %v2581, %v2594
    %v2596 = vpop.f32.mrf.mxu0
    %v2597 = vadd.f32 %v2583, %v2596
    %2598 = vdwg.mxu0
    %2599 = vmatpush.bf16.msra.mxu0 %v2000
    %2600 = vmatpush.bf16.msra.mxu0 %v1984
    %2601 = vmatpush.bf16.msra.mxu0 %v1968
    %2602 = vmatpush.bf16.msra.mxu0 %v1952
    %2603 = vmatpush.bf16.msra.mxu0 %v1936
    %2604 = vmatpush.bf16.msra.mxu0 %v1920
    %2605 = vmatpush.bf16.msra.mxu0 %v1904
    %2606 = vmatpush.bf16.msra.mxu0 %v1888
    %2607 = vmatmul.bf16.gmra.mxu0 %v1297
    %v2608 = vpop.f32.mrf.mxu0
    %v2609 = vadd.f32 0.0, %v2608
    %v2610 = vpop.f32.mrf.mxu0
    %v2611 = vadd.f32 0.0, %v2610
    %2612 = vdwg.mxu0
    %2613 = vmatpush.bf16.msra.mxu0 0
    %2614 = vmatpush.bf16.msra.mxu0 0
    %2615 = vmatpush.bf16.msra.mxu0 0
    %2616 = vmatpush.bf16.msra.mxu0 0
    %2617 = vmatpush.bf16.msra.mxu0 %v2064
    %2618 = vmatpush.bf16.msra.mxu0 %v2048
    %2619 = vmatpush.bf16.msra.mxu0 %v2032
    %2620 = vmatpush.bf16.msra.mxu0 %v2016
    %2621 = vmatmul.bf16.gmra.mxu0 %v2261
    %v2622 = vpop.f32.mrf.mxu0
    %v2623 = vadd.f32 %v2609, %v2622
    %v2624 = vpop.f32.mrf.mxu0
    %v2625 = vadd.f32 %v2611, %v2624
    %2626 = vdwg.mxu0
    %2627 = vmatpush.bf16.msra.mxu0 %v2001
    %2628 = vmatpush.bf16.msra.mxu0 %v1985
    %2629 = vmatpush.bf16.msra.mxu0 %v1969
    %2630 = vmatpush.bf16.msra.mxu0 %v1953
    %2631 = vmatpush.bf16.msra.mxu0 %v1937
    %2632 = vmatpush.bf16.msra.mxu0 %v1921
    %2633 = vmatpush.bf16.msra.mxu0 %v1905
    %2634 = vmatpush.bf16.msra.mxu0 %v1889
    %2635 = vmatmul.bf16.gmra.mxu0 %v1297
    %v2636 = vpop.f32.mrf.mxu0
    %v2637 = vadd.f32 0.0, %v2636
    %v2638 = vpop.f32.mrf.mxu0
    %v2639 = vadd.f32 0.0, %v2638
    %2640 = vdwg.mxu0
    %2641 = vmatpush.bf16.msra.mxu0 0
    %2642 = vmatpush.bf16.msra.mxu0 0
    %2643 = vmatpush.bf16.msra.mxu0 0
    %2644 = vmatpush.bf16.msra.mxu0 0
    %2645 = vmatpush.bf16.msra.mxu0 %v2065
    %2646 = vmatpush.bf16.msra.mxu0 %v2049
    %2647 = vmatpush.bf16.msra.mxu0 %v2033
    %2648 = vmatpush.bf16.msra.mxu0 %v2017
    %2649 = vmatmul.bf16.gmra.mxu0 %v2261
    %v2650 = vpop.f32.mrf.mxu0
    %v2651 = vadd.f32 %v2637, %v2650
    %v2652 = vpop.f32.mrf.mxu0
    %v2653 = vadd.f32 %v2639, %v2652
    %2654 = vdwg.mxu0
    %2655 = vmatpush.bf16.msra.mxu0 %v2002
    %2656 = vmatpush.bf16.msra.mxu0 %v1986
    %2657 = vmatpush.bf16.msra.mxu0 %v1970
    %2658 = vmatpush.bf16.msra.mxu0 %v1954
    %2659 = vmatpush.bf16.msra.mxu0 %v1938
    %2660 = vmatpush.bf16.msra.mxu0 %v1922
    %2661 = vmatpush.bf16.msra.mxu0 %v1906
    %2662 = vmatpush.bf16.msra.mxu0 %v1890
    %2663 = vmatmul.bf16.gmra.mxu0 %v1297
    %v2664 = vpop.f32.mrf.mxu0
    %v2665 = vadd.f32 0.0, %v2664
    %v2666 = vpop.f32.mrf.mxu0
    %v2667 = vadd.f32 0.0, %v2666
    %2668 = vdwg.mxu0
    %2669 = vmatpush.bf16.msra.mxu0 0
    %2670 = vmatpush.bf16.msra.mxu0 0
    %2671 = vmatpush.bf16.msra.mxu0 0
    %2672 = vmatpush.bf16.msra.mxu0 0
    %2673 = vmatpush.bf16.msra.mxu0 %v2066
    %2674 = vmatpush.bf16.msra.mxu0 %v2050
    %2675 = vmatpush.bf16.msra.mxu0 %v2034
    %2676 = vmatpush.bf16.msra.mxu0 %v2018
    %2677 = vmatmul.bf16.gmra.mxu0 %v2261
    %v2678 = vpop.f32.mrf.mxu0
    %v2679 = vadd.f32 %v2665, %v2678
    %v2680 = vpop.f32.mrf.mxu0
    %v2681 = vadd.f32 %v2667, %v2680
    %2682 = vdwg.mxu0
    %2683 = vmatpush.bf16.msra.mxu0 %v2003
    %2684 = vmatpush.bf16.msra.mxu0 %v1987
    %2685 = vmatpush.bf16.msra.mxu0 %v1971
    %2686 = vmatpush.bf16.msra.mxu0 %v1955
    %2687 = vmatpush.bf16.msra.mxu0 %v1939
    %2688 = vmatpush.bf16.msra.mxu0 %v1923
    %2689 = vmatpush.bf16.msra.mxu0 %v1907
    %2690 = vmatpush.bf16.msra.mxu0 %v1891
    %2691 = vmatmul.bf16.gmra.mxu0 %v1297
    %v2692 = vpop.f32.mrf.mxu0
    %v2693 = vadd.f32 0.0, %v2692
    %v2694 = vpop.f32.mrf.mxu0
    %v2695 = vadd.f32 0.0, %v2694
    %2696 = vdwg.mxu0
    %2697 = vmatpush.bf16.msra.mxu0 0
    %2698 = vmatpush.bf16.msra.mxu0 0
    %2699 = vmatpush.bf16.msra.mxu0 0
    %2700 = vmatpush.bf16.msra.mxu0 0
    %2701 = vmatpush.bf16.msra.mxu0 %v2067
    %2702 = vmatpush.bf16.msra.mxu0 %v2051
    %2703 = vmatpush.bf16.msra.mxu0 %v2035
    %2704 = vmatpush.bf16.msra.mxu0 %v2019
    %2705 = vmatmul.bf16.gmra.mxu0 %v2261
    %v2706 = vpop.f32.mrf.mxu0
    %v2707 = vadd.f32 %v2693, %v2706
    %v2708 = vpop.f32.mrf.mxu0
    %v2709 = vadd.f32 %v2695, %v2708
    %2710 = vdwg.mxu0
    %v2711 = vlaneseq
    %v2712 = vshrl.u32 %v2711, 7
    %v2713 = vadd.s32 %v2712, 8
    %v2714 = vand.u32 %v2712, 7
    %v2715 = vand.u32 %v2713, 7
    %v2716 = vlaneseq
    %v2717 = vand.u32 %v2716, 127
    %v2718 = vadd.s32 %v2717, 128
    %v2719 = vadd.s32 %v2717, 256
    %v2720 = vadd.s32 %v2717, 384
    %v2721 = vadd.s32 %v2717, 512
    %v2722 = vadd.s32 %v2717, 640
    %v2723 = vadd.s32 %v2717, 768
    %v2724 = vadd.s32 %v2717, 896
    %v2725 = vadd.s32 %v2717, 1024
    %v2726 = vadd.s32 %v2717, 1152
    %v2727 = vadd.s32 %v2717, 1280
    %v2728 = vadd.s32 %v2717, 1408
    %v2729 = vadd.s32 %v2717, 1536
    %v2730 = vadd.s32 %v2717, 1664
    %v2731 = vadd.s32 %v2717, 1792
    %v2732 = vadd.s32 %v2717, 1920
    %v2733 = vshra.s32 %v2717, 8
    %v2734 = vshra.s32 %v2718, 8
    %v2735 = vshra.s32 %v2719, 8
    %v2736 = vshra.s32 %v2720, 8
    %v2737 = vshra.s32 %v2721, 8
    %v2738 = vshra.s32 %v2722, 8
    %v2739 = vshra.s32 %v2723, 8
    %v2740 = vshra.s32 %v2724, 8
    %v2741 = vshra.s32 %v2725, 8
    %v2742 = vshra.s32 %v2726, 8
    %v2743 = vshra.s32 %v2727, 8
    %v2744 = vshra.s32 %v2728, 8
    %v2745 = vshra.s32 %v2729, 8
    %v2746 = vshra.s32 %v2730, 8
    %v2747 = vshra.s32 %v2731, 8
    %v2748 = vshra.s32 %v2732, 8
    %vm2749 = vcmp.eq.s32.totalorder %v2714, %v2733
    %vm2750 = vcmp.eq.s32.totalorder %v2714, %v2734
    %vm2751 = vcmp.eq.s32.totalorder %v2714, %v2735
    %vm2752 = vcmp.eq.s32.totalorder %v2714, %v2736
    %vm2753 = vcmp.eq.s32.totalorder %v2714, %v2737
    %vm2754 = vcmp.eq.s32.totalorder %v2714, %v2738
    %vm2755 = vcmp.eq.s32.totalorder %v2714, %v2739
    %vm2756 = vcmp.eq.s32.totalorder %v2714, %v2740
    %vm2757 = vcmp.eq.s32.totalorder %v2714, %v2741
    %vm2758 = vcmp.eq.s32.totalorder %v2714, %v2742
    %vm2759 = vcmp.eq.s32.totalorder %v2714, %v2743
    %vm2760 = vcmp.eq.s32.totalorder %v2714, %v2744
    %vm2761 = vcmp.eq.s32.totalorder %v2714, %v2745
    %vm2762 = vcmp.eq.s32.totalorder %v2714, %v2746
    %vm2763 = vcmp.eq.s32.totalorder %v2714, %v2747
    %vm2764 = vcmp.eq.s32.totalorder %v2714, %v2748
    %vm2765 = vcmp.eq.s32.totalorder %v2715, %v2733
    %vm2766 = vcmp.eq.s32.totalorder %v2715, %v2734
    %vm2767 = vcmp.eq.s32.totalorder %v2715, %v2735
    %vm2768 = vcmp.eq.s32.totalorder %v2715, %v2736
    %vm2769 = vcmp.eq.s32.totalorder %v2715, %v2737
    %vm2770 = vcmp.eq.s32.totalorder %v2715, %v2738
    %vm2771 = vcmp.eq.s32.totalorder %v2715, %v2739
    %vm2772 = vcmp.eq.s32.totalorder %v2715, %v2740
    %vm2773 = vcmp.eq.s32.totalorder %v2715, %v2741
    %vm2774 = vcmp.eq.s32.totalorder %v2715, %v2742
    %vm2775 = vcmp.eq.s32.totalorder %v2715, %v2743
    %vm2776 = vcmp.eq.s32.totalorder %v2715, %v2744
    %vm2777 = vcmp.eq.s32.totalorder %v2715, %v2745
    %vm2778 = vcmp.eq.s32.totalorder %v2715, %v2746
    %vm2779 = vcmp.eq.s32.totalorder %v2715, %v2747
    %vm2780 = vcmp.eq.s32.totalorder %v2715, %v2748
    %v2781 = vsel %vm2749, %v2287, 0.0
    %v2782 = vsel %vm2750, %v2315, 0.0
    %v2783 = vsel %vm2751, %v2343, 0.0
    %v2784 = vsel %vm2752, %v2371, 0.0
    %v2785 = vsel %vm2753, %v2399, 0.0
    %v2786 = vsel %vm2754, %v2427, 0.0
    %v2787 = vsel %vm2755, %v2455, 0.0
    %v2788 = vsel %vm2756, %v2483, 0.0
    %v2789 = vsel %vm2757, %v2511, 0.0
    %v2790 = vsel %vm2758, %v2539, 0.0
    %v2791 = vsel %vm2759, %v2567, 0.0
    %v2792 = vsel %vm2760, %v2595, 0.0
    %v2793 = vsel %vm2761, %v2623, 0.0
    %v2794 = vsel %vm2762, %v2651, 0.0
    %v2795 = vsel %vm2763, %v2679, 0.0
    %v2796 = vsel %vm2764, %v2707, 0.0
    %v2797 = vsel %vm2765, %v2289, 0.0
    %v2798 = vsel %vm2766, %v2317, 0.0
    %v2799 = vsel %vm2767, %v2345, 0.0
    %v2800 = vsel %vm2768, %v2373, 0.0
    %v2801 = vsel %vm2769, %v2401, 0.0
    %v2802 = vsel %vm2770, %v2429, 0.0
    %v2803 = vsel %vm2771, %v2457, 0.0
    %v2804 = vsel %vm2772, %v2485, 0.0
    %v2805 = vsel %vm2773, %v2513, 0.0
    %v2806 = vsel %vm2774, %v2541, 0.0
    %v2807 = vsel %vm2775, %v2569, 0.0
    %v2808 = vsel %vm2776, %v2597, 0.0
    %v2809 = vsel %vm2777, %v2625, 0.0
    %v2810 = vsel %vm2778, %v2653, 0.0
    %v2811 = vsel %vm2779, %v2681, 0.0
    %v2812 = vsel %vm2780, %v2709, 0.0
    %v2813 = vadd.f32 %v2781, %v2783
    %v2814 = vadd.f32 %v2782, %v2784
    %v2815 = vadd.f32 %v2797, %v2799
    %v2816 = vadd.f32 %v2798, %v2800
    %v2817 = vadd.f32 %v2813, %v2785
    %v2818 = vadd.f32 %v2814, %v2786
    %v2819 = vadd.f32 %v2815, %v2801
    %v2820 = vadd.f32 %v2816, %v2802
    %v2821 = vadd.f32 %v2817, %v2787
    %v2822 = vadd.f32 %v2818, %v2788
    %v2823 = vadd.f32 %v2819, %v2803
    %v2824 = vadd.f32 %v2820, %v2804
    %v2825 = vadd.f32 %v2821, %v2789
    %v2826 = vadd.f32 %v2822, %v2790
    %v2827 = vadd.f32 %v2823, %v2805
    %v2828 = vadd.f32 %v2824, %v2806
    %v2829 = vadd.f32 %v2825, %v2791
    %v2830 = vadd.f32 %v2826, %v2792
    %v2831 = vadd.f32 %v2827, %v2807
    %v2832 = vadd.f32 %v2828, %v2808
    %v2833 = vadd.f32 %v2829, %v2793
    %v2834 = vadd.f32 %v2830, %v2794
    %v2835 = vadd.f32 %v2831, %v2809
    %v2836 = vadd.f32 %v2832, %v2810
    %v2837 = vadd.f32 %v2833, %v2795
    %v2838 = vadd.f32 %v2834, %v2796
    %v2839 = vadd.f32 %v2835, %v2811
    %v2840 = vadd.f32 %v2836, %v2812
    %v2841 = vrot.slane %v2837, 4
    %v2842 = vadd.f32 %v2837, %v2841
    %v2843 = vrot.slane %v2842, 2
    %v2844 = vadd.f32 %v2842, %v2843
    %v2845 = vrot.slane %v2844, 1
    %v2846 = vadd.f32 %v2844, %v2845
    %v2847 = vrot.slane %v2838, 4
    %v2848 = vadd.f32 %v2838, %v2847
    %v2849 = vrot.slane %v2848, 2
    %v2850 = vadd.f32 %v2848, %v2849
    %v2851 = vrot.slane %v2850, 1
    %v2852 = vadd.f32 %v2850, %v2851
    %v2853 = vrot.slane %v2839, 4
    %v2854 = vadd.f32 %v2839, %v2853
    %v2855 = vrot.slane %v2854, 2
    %v2856 = vadd.f32 %v2854, %v2855
    %v2857 = vrot.slane %v2856, 1
    %v2858 = vadd.f32 %v2856, %v2857
    %v2859 = vrot.slane %v2840, 4
    %v2860 = vadd.f32 %v2840, %v2859
    %v2861 = vrot.slane %v2860, 2
    %v2862 = vadd.f32 %v2860, %v2861
    %v2863 = vrot.slane %v2862, 1
    %v2864 = vadd.f32 %v2862, %v2863
    %v2866 = vperm.slane %v46, 0
    %v2867 = vperm.slane %v46, 1
    %v2870 = vadd.f32 %v2846, %v2866
    %v2871 = vadd.f32 %v2852, %v2867
    %v2872 = vadd.f32 %v2858, %v2866
    %v2873 = vadd.f32 %v2864, %v2867
    %v2874 = vmul.f32 %v2870, %v2870
    %v2875 = vmul.f32 %v2871, %v2871
    %v2876 = vmul.f32 %v2872, %v2872
    %v2877 = vmul.f32 %v2873, %v2873
    %v2882 = vrot.slane %v2876, 7
    %v2883 = vsel %vm231, %v2882, %v2874
    %v2884 = vrot.slane %v2877, 7
    %v2885 = vsel %vm231, %v2884, %v2875
    %v2888 = vsel %vm437, %v2883, 0.0
    %v2889 = vsel %vm437, %v2885, 0.0
    %v2890 = vadd.f32 %v2888, %v2889
    %2891 = vadd.xlane.f32.xlu0 %v2890
    %v2892 = vpop.xlane.xlu0 %2891
    %v2893 = vmax.f32 %v2892, 1e-24
    %v2894 = vrsqrt.pop %v2893
    %v2895 = vmul.f32 %v2894, %v2893
    %v2896 = vmul.f32 %v2895, %v2894
    %v2897 = vmul.f32 0.5, %v2896
    %v2898 = vsub.f32 1.5, %v2897
    %v2899 = vmul.f32 %v2894, %v2898
    %vm2900 = vweird.f32 %v2893
    %vm2901 = vweird.f32 %v2894
    %vm2902 = vmor %vm2900, %vm2901
    %v2903 = vsel %vm2902, %v2894, %v2899
    %v2905 = vrot.slane %v2903, 1
    %v2908 = vmul.f32 %v2870, %v2903
    %v2909 = vmul.f32 %v2871, %v2903
    %v2910 = vmul.f32 %v2872, %v2905
    %v2911 = vmul.f32 %v2873, %v2905
    %v2916 = vrot.slane %v2910, 7
    %v2917 = vsel %vm231, %v2916, %v2908
    %v2918 = vrot.slane %v2911, 7
    %v2919 = vsel %vm231, %v2918, %v2909
    %v2922 = vpack.c.bf16 %v454, %v454
    %v2923 = vpack.c.bf16 %v455, %v455
    %v2924 = vpack.c.bf16 %v2917, %v2917
    %v2925 = vpack.c.bf16 %v2919, %v2919
    %v2990 = vunpack.c.l.b16 %v129
    %v2991 = vunpack.c.l.b16 %v130
    %v2992 = vunpack.c.l.b16 %v131
    %v2993 = vunpack.c.l.b16 %v132
    %v2994 = vunpack.c.l.b16 %v133
    %v2995 = vunpack.c.l.b16 %v134
    %v2996 = vunpack.c.l.b16 %v135
    %v2997 = vunpack.c.l.b16 %v136
    %v2998 = vunpack.c.l.b16 %v137
    %v2999 = vunpack.c.l.b16 %v138
    %v3000 = vunpack.c.l.b16 %v139
    %v3001 = vunpack.c.l.b16 %v140
    %v3002 = vunpack.c.l.b16 %v141
    %v3003 = vunpack.c.l.b16 %v142
    %v3004 = vunpack.c.l.b16 %v143
    %v3005 = vunpack.c.l.b16 %v144
    %v3006 = vunpack.c.l.b16 %v145
    %v3007 = vunpack.c.l.b16 %v146
    %v3008 = vunpack.c.l.b16 %v147
    %v3009 = vunpack.c.l.b16 %v148
    %v3010 = vunpack.c.l.b16 %v149
    %v3011 = vunpack.c.l.b16 %v150
    %v3012 = vunpack.c.l.b16 %v151
    %v3013 = vunpack.c.l.b16 %v152
    %v3014 = vunpack.c.l.b16 %v153
    %v3015 = vunpack.c.l.b16 %v154
    %v3016 = vunpack.c.l.b16 %v155
    %v3017 = vunpack.c.l.b16 %v156
    %v3018 = vunpack.c.l.b16 %v157
    %v3019 = vunpack.c.l.b16 %v158
    %v3020 = vunpack.c.l.b16 %v159
    %v3021 = vunpack.c.l.b16 %v160
    %v3022 = vunpack.c.l.b16 %v161
    %v3023 = vunpack.c.l.b16 %v162
    %v3024 = vunpack.c.l.b16 %v163
    %v3025 = vunpack.c.l.b16 %v164
    %v3026 = vunpack.c.l.b16 %v165
    %v3027 = vunpack.c.l.b16 %v166
    %v3028 = vunpack.c.l.b16 %v167
    %v3029 = vunpack.c.l.b16 %v168
    %v3030 = vunpack.c.l.b16 %v169
    %v3031 = vunpack.c.l.b16 %v170
    %v3032 = vunpack.c.l.b16 %v171
    %v3033 = vunpack.c.l.b16 %v172
    %v3034 = vunpack.c.l.b16 %v173
    %v3035 = vunpack.c.l.b16 %v174
    %v3036 = vunpack.c.l.b16 %v175
    %v3037 = vunpack.c.l.b16 %v176
    %v3038 = vunpack.c.l.b16 %v177
    %v3039 = vunpack.c.l.b16 %v178
    %v3040 = vunpack.c.l.b16 %v179
    %v3041 = vunpack.c.l.b16 %v180
    %v3042 = vunpack.c.l.b16 %v181
    %v3043 = vunpack.c.l.b16 %v182
    %v3044 = vunpack.c.l.b16 %v183
    %v3045 = vunpack.c.l.b16 %v184
    %v3046 = vunpack.c.l.b16 %v185
    %v3047 = vunpack.c.l.b16 %v186
    %v3048 = vunpack.c.l.b16 %v187
    %v3049 = vunpack.c.l.b16 %v188
    %v3050 = vunpack.c.l.b16 %v189
    %v3051 = vunpack.c.l.b16 %v190
    %v3052 = vunpack.c.l.b16 %v191
    %v3053 = vunpack.c.l.b16 %v192
    %v3054 = vpack.c.b16 %v2991, %v2990
    %v3055 = vpack.c.b16 %v2993, %v2992
    %v3056 = vpack.c.b16 %v2995, %v2994
    %v3057 = vpack.c.b16 %v2997, %v2996
    %v3058 = vpack.c.b16 %v2999, %v2998
    %v3059 = vpack.c.b16 %v3001, %v3000
    %v3060 = vpack.c.b16 %v3003, %v3002
    %v3061 = vpack.c.b16 %v3005, %v3004
    %v3062 = vpack.c.b16 %v3007, %v3006
    %v3063 = vpack.c.b16 %v3009, %v3008
    %v3064 = vpack.c.b16 %v3011, %v3010
    %v3065 = vpack.c.b16 %v3013, %v3012
    %v3066 = vpack.c.b16 %v3015, %v3014
    %v3067 = vpack.c.b16 %v3017, %v3016
    %v3068 = vpack.c.b16 %v3019, %v3018
    %v3069 = vpack.c.b16 %v3021, %v3020
    %v3070 = vpack.c.b16 %v3023, %v3022
    %v3071 = vpack.c.b16 %v3025, %v3024
    %v3072 = vpack.c.b16 %v3027, %v3026
    %v3073 = vpack.c.b16 %v3029, %v3028
    %v3074 = vpack.c.b16 %v3031, %v3030
    %v3075 = vpack.c.b16 %v3033, %v3032
    %v3076 = vpack.c.b16 %v3035, %v3034
    %v3077 = vpack.c.b16 %v3037, %v3036
    %v3078 = vpack.c.b16 %v3039, %v3038
    %v3079 = vpack.c.b16 %v3041, %v3040
    %v3080 = vpack.c.b16 %v3043, %v3042
    %v3081 = vpack.c.b16 %v3045, %v3044
    %v3082 = vpack.c.b16 %v3047, %v3046
    %v3083 = vpack.c.b16 %v3049, %v3048
    %v3084 = vpack.c.b16 %v3051, %v3050
    %v3085 = vpack.c.b16 %v3053, %v3052
    %3118 = vmatpush.bf16.msra.mxu0 %v3061
    %3119 = vmatpush.bf16.msra.mxu0 %v3060
    %3120 = vmatpush.bf16.msra.mxu0 %v3059
    %3121 = vmatpush.bf16.msra.mxu0 %v3058
    %3122 = vmatpush.bf16.msra.mxu0 %v3057
    %3123 = vmatpush.bf16.msra.mxu0 %v3056
    %3124 = vmatpush.bf16.msra.mxu0 %v3055
    %3125 = vmatpush.bf16.msra.mxu0 %v3054
    %3126 = vmatmul.bf16.gmra.mxu0 %v2922
    %v3127 = vpop.f32.mrf.mxu0
    %v3128 = vadd.f32 %v51, %v3127
    %v3129 = vpop.f32.mrf.mxu0
    %3130 = vdwg.mxu0
    %3131 = vmatpush.bf16.msra.mxu0 %v3069
    %3132 = vmatpush.bf16.msra.mxu0 %v3068
    %3133 = vmatpush.bf16.msra.mxu0 %v3067
    %3134 = vmatpush.bf16.msra.mxu0 %v3066
    %3135 = vmatpush.bf16.msra.mxu0 %v3065
    %3136 = vmatpush.bf16.msra.mxu0 %v3064
    %3137 = vmatpush.bf16.msra.mxu0 %v3063
    %3138 = vmatpush.bf16.msra.mxu0 %v3062
    %3139 = vmatmul.bf16.gmra.mxu0 %v2923
    %v3140 = vpop.f32.mrf.mxu0
    %v3141 = vadd.f32 %v3128, %v3140
    %v3142 = vpop.f32.mrf.mxu0
    %3143 = vdwg.mxu0
    %3144 = vmatpush.bf16.msra.mxu0 %v3077
    %3145 = vmatpush.bf16.msra.mxu0 %v3076
    %3146 = vmatpush.bf16.msra.mxu0 %v3075
    %3147 = vmatpush.bf16.msra.mxu0 %v3074
    %3148 = vmatpush.bf16.msra.mxu0 %v3073
    %3149 = vmatpush.bf16.msra.mxu0 %v3072
    %3150 = vmatpush.bf16.msra.mxu0 %v3071
    %3151 = vmatpush.bf16.msra.mxu0 %v3070
    %3152 = vmatmul.bf16.gmra.mxu0 %v2924
    %v3153 = vpop.f32.mrf.mxu0
    %v3154 = vadd.f32 %v3141, %v3153
    %v3155 = vpop.f32.mrf.mxu0
    %3156 = vdwg.mxu0
    %3157 = vmatpush.bf16.msra.mxu0 %v3085
    %3158 = vmatpush.bf16.msra.mxu0 %v3084
    %3159 = vmatpush.bf16.msra.mxu0 %v3083
    %3160 = vmatpush.bf16.msra.mxu0 %v3082
    %3161 = vmatpush.bf16.msra.mxu0 %v3081
    %3162 = vmatpush.bf16.msra.mxu0 %v3080
    %3163 = vmatpush.bf16.msra.mxu0 %v3079
    %3164 = vmatpush.bf16.msra.mxu0 %v3078
    %3165 = vmatmul.bf16.gmra.mxu0 %v2925
    %v3166 = vpop.f32.mrf.mxu0
    %v3167 = vadd.f32 %v3154, %v3166
    %v3168 = vpop.f32.mrf.mxu0
    %3169 = vdwg.mxu0
    %3170 = vst [vmem:[#allocation5] sm:$0x3] %v3167
    // Predicated region
    $region26: #{tpu_custom_call.1} parent=1 // pred_check
      _
    $region27: #{tpu_custom_call.1} parent=1 // pred_check_branch
      %3172 = sbr.rel (0) target = $region29
    $region28: #{tpu_custom_call.1} parent=1 // pred_region
      %3174 = vsyncadd [#allocation4], 0
      %s3176 = sshll.u32 [#allocation5], 4
      %s3177 = int_to_ptr.vmem [resolvable:$true] %s3176
      %s3178 = sshll.u32 %s5, 4
      %s3179 = int_to_ptr.hbm [resolvable:$true] %s3178
      %3181 = dma.vmem_to_hbm [thread:$0]  %s3177, 32, %s3179, [#allocation4]
    $region29: #{tpu_custom_call.1} parent=1 // pred_fallthru
      _
    // Predicated region
    $region30: #{tpu_custom_call.1} parent=1 // pred_check
      _
    $region31: #{tpu_custom_call.1} parent=1 // pred_check_branch
      %3183 = sbr.rel (0) target = $region33
    $region32: #{tpu_custom_call.1} parent=1 // pred_region
      %3185 = dma.done [#allocation4], 32
    $region33: #{tpu_custom_call.1} parent=1 // pred_fallthru
      _
    %3186 = vsyncpa [#allocation3], 1
    %3187 = vsyncpa [#allocation4], 1

</llo_original>
